<compile_context>
chip_gen: v7x
topology: tpu7x:2x2x1
jax: 0.10.0
libtpu: 0.0.40
codegen_flags: <defaults>
</compile_context>

<pallas_src>
import functools

import jax
import jax.numpy as jnp
import numpy as np
from jax import lax
from jax.experimental import pallas as pl
from jax.experimental.pallas import tpu as pltpu

# ---- small, module-consistent sizes (Cora-like, shrunk) -------------------
N_NODES = 64        # number of graph nodes
N_EDGES = 256       # number of directed edges
F_IN = 16           # dataset.num_features (shrunk)
HIDDEN = 32         # hidden_channels (shrunk from 64)
HEADS = 4           # ATTENTION_HEADS
N_CLASSES = 7       # dataset.num_classes (Cora)
PAD_C2 = 128        # lane-dense padded width for the layer-2 output (7 -> 128)

NEG = -1e30


def fused_gat_kernel(x_ref, mask_ref, w1_ref, asrc1_ref, adst1_ref, b1_ref,
                     hmask_ref, w2_ref, asrc2_ref, adst2_ref, b2_ref,
                     out_ref, *, heads):
    """Both GATConv layers, entirely in VMEM (single invocation, no grid).

    x_ref     : [N, F_in]
    mask_ref  : [N, N]   additive edge mask (0 on edges incl. self loops, -1e30 elsewhere)
    w1_ref    : [F_in, H*C1]
    asrc1_ref : [H, H*C1]   block-structured (row h holds a_src[h] in cols h*C1:(h+1)*C1)
    adst1_ref : [H, H*C1]   block-structured (dst attention)
    b1_ref    : [1, H*C1]
    hmask_ref : [H, H*C1]   row h = 1 on head-h columns, 0 elsewhere
    w2_ref    : [H*C1, 128] (zero-padded cols >= N_CLASSES)
    asrc2_ref : [1, 128]    (zero-padded)
    adst2_ref : [1, 128]    (zero-padded)
    b2_ref    : [1, 128]    (zero-padded)
    out_ref   : [N, 128]    (valid logits in cols [:N_CLASSES])
    """
    f32 = jnp.float32
    x = x_ref[...].astype(f32)
    mask_bias = mask_ref[...]           # head-invariant, loaded once
    hmask = hmask_ref[...]

    # ---------------- layer 1 : GATConv(F_in -> C1, heads=H, concat) -------
    xw = jnp.dot(x, w1_ref[...], preferred_element_type=f32)       # [N, H*C1]

    # Batched attention logits for all heads (two MXU matmuls, no per-head tiny ops).
    #   a_dst[:, h] = <xW_h[i], a_dst_h>   ->  [N, H]
    #   a_src[h, :] = <xW_h[j], a_src_h>   ->  [H, N]
    a_dst = lax.dot_general(xw, adst1_ref[...], (((1,), (1,)), ((), ())),
                            preferred_element_type=f32)             # [N, H]
    a_src = lax.dot_general(asrc1_ref[...], xw, (((1,), (1,)), ((), ())),
                            preferred_element_type=f32)             # [H, N]

    alphas = []
    blocks = []
    for h in range(heads):                                          # static, unrolled
        z = a_dst[:, h:h + 1] + a_src[h:h + 1, :]                   # [N, N]
        z = jnp.where(z > 0, z, 0.2 * z)                            # LeakyReLU(0.2)
        z = z + mask_bias                                           # additive edge mask
        z = z - jnp.max(z, axis=-1, keepdims=True)                  # stable softmax
        p = jnp.exp(z)
        denom = jnp.sum(p, axis=-1, keepdims=True)
        alphas.append(p * pl.reciprocal(denom, approx=False))       # [N, N]
        blocks.append(xw * hmask[h:h + 1, :])                       # xW_h in its col block
    alpha_cat = jnp.concatenate(alphas, axis=1)                     # [N, H*N]
    xw_blkdiag = jnp.concatenate(blocks, axis=0)                    # [H*N, H*C1]

    # One batched aggregation matmul, result already in [N, H*C1] concat-head layout.
    h1 = jnp.dot(alpha_cat, xw_blkdiag, preferred_element_type=f32) + b1_ref[...]

    # ---------------- layer 2 : GATConv(H*C1 -> classes, heads=1) ----------
    xw2 = jnp.dot(h1, w2_ref[...], preferred_element_type=f32)      # [N, 128] (pad cols = 0)
    a_dst2 = lax.dot_general(xw2, adst2_ref[...], (((1,), (1,)), ((), ())),
                             preferred_element_type=f32)            # [N, 1]
    a_src2 = lax.dot_general(asrc2_ref[...], xw2, (((1,), (1,)), ((), ())),
                             preferred_element_type=f32)            # [1, N]
    z = a_dst2 + a_src2
    z = jnp.where(z > 0, z, 0.2 * z)
    z = z + mask_bias
    z = z - jnp.max(z, axis=-1, keepdims=True)
    p = jnp.exp(z)
    denom = jnp.sum(p, axis=-1, keepdims=True)
    alpha2 = p * pl.reciprocal(denom, approx=False)                 # [N, N]

    # Single lane-dense store (128 lanes) -- no masked partial stores.
    out_ref[...] = (jnp.dot(alpha2, xw2, preferred_element_type=f32)
                    + b2_ref[...]).astype(out_ref.dtype)


def _block_expand(a):
    """[H, C] -> [H, H*C] where row h carries a[h] in column block h, zeros elsewhere."""
    h, c = a.shape
    eye = jnp.eye(h, dtype=a.dtype)
    return (eye[:, :, None] * a[None, :, :]).reshape(h, h * c)


@jax.jit
def gnn_forward(x, adj, params):
    n = x.shape[0]

    # ---- wrapper-side layout plumbing (plain JAX, fused by XLA) ----------
    mask_bias = jnp.where(adj > 0, 0.0, NEG).astype(jnp.float32)     # [N, N]
    asrc1_blk = _block_expand(params["asrc1"])                        # [H, H*C1]
    adst1_blk = _block_expand(params["adst1"])                        # [H, H*C1]
    head_mask = _block_expand(jnp.ones((HEADS, HIDDEN), jnp.float32))  # [H, H*C1]

    pad = PAD_C2 - N_CLASSES
    w2p = jnp.pad(params["w2"], ((0, 0), (0, pad)))                   # [H*C1, 128]
    asrc2p = jnp.pad(params["asrc2"], ((0, 0), (0, pad)))             # [1, 128]
    adst2p = jnp.pad(params["adst2"], ((0, 0), (0, pad)))             # [1, 128]
    b2p = jnp.pad(params["b2"], ((0, 0), (0, pad)))                   # [1, 128]

    kernel = functools.partial(fused_gat_kernel, heads=HEADS)
    vmem = pl.BlockSpec(memory_space=pltpu.MemorySpace.VMEM)
    out_padded = pl.pallas_call(
        kernel,
        out_shape=jax.ShapeDtypeStruct((n, PAD_C2), jnp.float32),
        in_specs=[vmem] * 11,
        out_specs=vmem,
    )(x, mask_bias, params["w1"], asrc1_blk, adst1_blk, params["b1"], head_mask,
      w2p, asrc2p, adst2p, b2p)
    # dropout(p=0.5, training=False) before each layer -> identity (eval mode)
    return out_padded[:, :N_CLASSES]


# ---- pure-JAX reference (same dense-GAT math) for a correctness check -----
def gat_ref(x, adj, w, asrc, adst, bias, heads, out_ch):
    xw = x @ w
    outs = []
    for h in range(heads):
        xh = xw[:, h * out_ch:(h + 1) * out_ch]
        a_dst = jnp.sum(xh * adst[h], -1, keepdims=True)
        a_src = jnp.sum(xh * asrc[h], -1)[None, :]
        z = a_dst + a_src
        z = jnp.where(z > 0, z, 0.2 * z)
        z = jnp.where(adj > 0, z, NEG)
        z = z - z.max(-1, keepdims=True)
        p = jnp.exp(z)
        alpha = p / p.sum(-1, keepdims=True)
        outs.append(alpha @ xh)
    return jnp.concatenate(outs, -1) + bias


def gnn_ref(x, adj, p):
    h = gat_ref(x, adj, p["w1"], p["asrc1"], p["adst1"], p["b1"], HEADS, HIDDEN)
    return gat_ref(h, adj, p["w2"], p["asrc2"], p["adst2"], p["b2"], 1, N_CLASSES)


if __name__ == "__main__":
    key = jax.random.PRNGKey(0)
    ks = jax.random.split(key, 12)

    # node features
    x = jax.random.normal(ks[0], (N_NODES, F_IN), dtype=jnp.float32)

    # synthetic edge_index [2, E] -> dense adjacency with self loops (plain JAX glue)
    src = jax.random.randint(ks[1], (N_EDGES,), 0, N_NODES)
    dst = jax.random.randint(ks[2], (N_EDGES,), 0, N_NODES)
    adj = jnp.zeros((N_NODES, N_NODES), jnp.float32).at[dst, src].set(1.0)
    adj = adj.at[jnp.arange(N_NODES), jnp.arange(N_NODES)].set(1.0)  # add_self_loops

    # deterministic parameters (shapes per GATConv __init__)
    params = {
        "w1":    0.1 * jax.random.normal(ks[3], (F_IN, HEADS * HIDDEN), jnp.float32),
        "asrc1": 0.1 * jax.random.normal(ks[4], (HEADS, HIDDEN), jnp.float32),
        "adst1": 0.1 * jax.random.normal(ks[5], (HEADS, HIDDEN), jnp.float32),
        "b1":    0.1 * jax.random.normal(ks[6], (1, HEADS * HIDDEN), jnp.float32),
        "w2":    0.1 * jax.random.normal(ks[7], (HEADS * HIDDEN, N_CLASSES), jnp.float32),
        "asrc2": 0.1 * jax.random.normal(ks[8], (1, N_CLASSES), jnp.float32),
        "adst2": 0.1 * jax.random.normal(ks[9], (1, N_CLASSES), jnp.float32),
        "b2":    0.1 * jax.random.normal(ks[10], (1, N_CLASSES), jnp.float32),
    }

    out = jax.block_until_ready(gnn_forward(x, adj, params))
    assert out.shape == (N_NODES, N_CLASSES)

    ref = jax.block_until_ready(gnn_ref(x, adj, params))
    np.testing.assert_allclose(np.asarray(out), np.asarray(ref), rtol=1e-4, atol=1e-4)

    print("KERNEL_OK")
</pallas_src>

<mosaic_0001>
module attributes {stable_mosaic.version = 11 : i64} {
  func.func @fused_gat_kernel(%arg0: memref<64x16xf32, #tpu.memory_space<vmem>>, %arg1: memref<64x64xf32, #tpu.memory_space<vmem>>, %arg2: memref<16x128xf32, #tpu.memory_space<vmem>>, %arg3: memref<4x128xf32, #tpu.memory_space<vmem>>, %arg4: memref<4x128xf32, #tpu.memory_space<vmem>>, %arg5: memref<1x128xf32, #tpu.memory_space<vmem>>, %arg6: memref<4x128xf32, #tpu.memory_space<vmem>>, %arg7: memref<128x128xf32, #tpu.memory_space<vmem>>, %arg8: memref<1x128xf32, #tpu.memory_space<vmem>>, %arg9: memref<1x128xf32, #tpu.memory_space<vmem>>, %arg10: memref<1x128xf32, #tpu.memory_space<vmem>>, %arg11: memref<64x128xf32, #tpu.memory_space<vmem>>) attributes {dimension_semantics = [], scalar_prefetch = 0 : i64, scratch_operands = 0 : i64, tpu.core_type = #tpu.core_type<tc>} {
    %c0 = arith.constant 0 : index
    %c0_0 = arith.constant 0 : index
    %0 = vector.load %arg0[%c0, %c0_0] : memref<64x16xf32, #tpu.memory_space<vmem>>, vector<64x16xf32>
    %c0_1 = arith.constant 0 : index
    %c0_2 = arith.constant 0 : index
    %1 = vector.load %arg1[%c0_1, %c0_2] : memref<64x64xf32, #tpu.memory_space<vmem>>, vector<64x64xf32>
    %c0_3 = arith.constant 0 : index
    %c0_4 = arith.constant 0 : index
    %2 = vector.load %arg6[%c0_3, %c0_4] : memref<4x128xf32, #tpu.memory_space<vmem>>, vector<4x128xf32>
    %c0_5 = arith.constant 0 : index
    %c0_6 = arith.constant 0 : index
    %3 = vector.load %arg2[%c0_5, %c0_6] : memref<16x128xf32, #tpu.memory_space<vmem>>, vector<16x128xf32>
    %cst = arith.constant dense<0.000000e+00> : vector<64x128xf32>
    %4 = tpu.matmul %0, %3, %cst {dimension_numbers = #tpu.dot_dimension_numbers<[1], [0], [0], [1], [0, 0, 1, 1], [], []>} : vector<64x16xf32>, vector<16x128xf32>, vector<64x128xf32> -> vector<64x128xf32>
    %c0_7 = arith.constant 0 : index
    %c0_8 = arith.constant 0 : index
    %5 = vector.load %arg4[%c0_7, %c0_8] : memref<4x128xf32, #tpu.memory_space<vmem>>, vector<4x128xf32>
    %cst_9 = arith.constant dense<0.000000e+00> : vector<64x4xf32>
    %6 = tpu.matmul %4, %5, %cst_9 {dimension_numbers = #tpu.dot_dimension_numbers<[1], [1], [0], [0], [0, 0, 1, 0], [], []>} : vector<64x128xf32>, vector<4x128xf32>, vector<64x4xf32> -> vector<64x4xf32>
    %c0_10 = arith.constant 0 : index
    %c0_11 = arith.constant 0 : index
    %7 = vector.load %arg3[%c0_10, %c0_11] : memref<4x128xf32, #tpu.memory_space<vmem>>, vector<4x128xf32>
    %cst_12 = arith.constant dense<0.000000e+00> : vector<4x64xf32>
    %8 = tpu.matmul %7, %4, %cst_12 {dimension_numbers = #tpu.dot_dimension_numbers<[1], [1], [0], [0], [0, 0, 1, 0], [], []>} : vector<4x128xf32>, vector<64x128xf32>, vector<4x64xf32> -> vector<4x64xf32>
    %9 = vector.extract_strided_slice %6 {offsets = [0, 0], sizes = [64, 1], strides = [1, 1]} : vector<64x4xf32> to vector<64x1xf32>
    %10 = vector.extract_strided_slice %8 {offsets = [0, 0], sizes = [1, 64], strides = [1, 1]} : vector<4x64xf32> to vector<1x64xf32>
    %11 = vector.broadcast %9 : vector<64x1xf32> to vector<64x64xf32>
    %12 = vector.broadcast %10 : vector<1x64xf32> to vector<64x64xf32>
    %13 = arith.addf %11, %12 : vector<64x64xf32>
    %cst_13 = arith.constant 0.000000e+00 : f32
    %14 = vector.broadcast %cst_13 : f32 to vector<64x64xf32>
    %15 = arith.cmpf ogt, %13, %14 : vector<64x64xf32>
    %cst_14 = arith.constant 2.000000e-01 : f32
    %16 = vector.broadcast %cst_14 : f32 to vector<64x64xf32>
    %17 = arith.mulf %16, %13 : vector<64x64xf32>
    %18 = arith.select %15, %13, %17 : vector<64x64xi1>, vector<64x64xf32>
    %19 = arith.addf %18, %1 : vector<64x64xf32>
    %cst_15 = arith.constant dense<0xFF800000> : vector<64xf32>
    %20 = vector.multi_reduction <maximumf>, %19, %cst_15 [1] : vector<64x64xf32> to vector<64xf32>
    %21 = vector.shape_cast %20 : vector<64xf32> to vector<64x1xf32>
    %22 = vector.broadcast %21 : vector<64x1xf32> to vector<64x64xf32>
    %23 = arith.subf %19, %22 : vector<64x64xf32>
    %24 = math.exp %23 : vector<64x64xf32>
    %cst_16 = arith.constant dense<0.000000e+00> : vector<64xf32>
    %25 = vector.multi_reduction <add>, %24, %cst_16 [1] : vector<64x64xf32> to vector<64xf32>
    %26 = vector.shape_cast %25 : vector<64xf32> to vector<64x1xf32>
    %27 = tpu.reciprocal %26 : vector<64x1xf32> -> vector<64x1xf32>
    %28 = vector.broadcast %27 : vector<64x1xf32> to vector<64x64xf32>
    %29 = arith.mulf %24, %28 : vector<64x64xf32>
    %30 = vector.extract_strided_slice %2 {offsets = [0, 0], sizes = [1, 128], strides = [1, 1]} : vector<4x128xf32> to vector<1x128xf32>
    %31 = vector.broadcast %30 : vector<1x128xf32> to vector<64x128xf32>
    %32 = arith.mulf %4, %31 : vector<64x128xf32>
    %33 = vector.extract_strided_slice %6 {offsets = [0, 1], sizes = [64, 1], strides = [1, 1]} : vector<64x4xf32> to vector<64x1xf32>
    %34 = vector.extract_strided_slice %8 {offsets = [1, 0], sizes = [1, 64], strides = [1, 1]} : vector<4x64xf32> to vector<1x64xf32>
    %35 = vector.broadcast %33 : vector<64x1xf32> to vector<64x64xf32>
    %36 = vector.broadcast %34 : vector<1x64xf32> to vector<64x64xf32>
    %37 = arith.addf %35, %36 : vector<64x64xf32>
    %cst_17 = arith.constant 0.000000e+00 : f32
    %38 = vector.broadcast %cst_17 : f32 to vector<64x64xf32>
    %39 = arith.cmpf ogt, %37, %38 : vector<64x64xf32>
    %cst_18 = arith.constant 2.000000e-01 : f32
    %40 = vector.broadcast %cst_18 : f32 to vector<64x64xf32>
    %41 = arith.mulf %40, %37 : vector<64x64xf32>
    %42 = arith.select %39, %37, %41 : vector<64x64xi1>, vector<64x64xf32>
    %43 = arith.addf %42, %1 : vector<64x64xf32>
    %cst_19 = arith.constant dense<0xFF800000> : vector<64xf32>
    %44 = vector.multi_reduction <maximumf>, %43, %cst_19 [1] : vector<64x64xf32> to vector<64xf32>
    %45 = vector.shape_cast %44 : vector<64xf32> to vector<64x1xf32>
    %46 = vector.broadcast %45 : vector<64x1xf32> to vector<64x64xf32>
    %47 = arith.subf %43, %46 : vector<64x64xf32>
    %48 = math.exp %47 : vector<64x64xf32>
    %cst_20 = arith.constant dense<0.000000e+00> : vector<64xf32>
    %49 = vector.multi_reduction <add>, %48, %cst_20 [1] : vector<64x64xf32> to vector<64xf32>
    %50 = vector.shape_cast %49 : vector<64xf32> to vector<64x1xf32>
    %51 = tpu.reciprocal %50 : vector<64x1xf32> -> vector<64x1xf32>
    %52 = vector.broadcast %51 : vector<64x1xf32> to vector<64x64xf32>
    %53 = arith.mulf %48, %52 : vector<64x64xf32>
    %54 = vector.extract_strided_slice %2 {offsets = [1, 0], sizes = [1, 128], strides = [1, 1]} : vector<4x128xf32> to vector<1x128xf32>
    %55 = vector.broadcast %54 : vector<1x128xf32> to vector<64x128xf32>
    %56 = arith.mulf %4, %55 : vector<64x128xf32>
    %57 = vector.extract_strided_slice %6 {offsets = [0, 2], sizes = [64, 1], strides = [1, 1]} : vector<64x4xf32> to vector<64x1xf32>
    %58 = vector.extract_strided_slice %8 {offsets = [2, 0], sizes = [1, 64], strides = [1, 1]} : vector<4x64xf32> to vector<1x64xf32>
    %59 = vector.broadcast %57 : vector<64x1xf32> to vector<64x64xf32>
    %60 = vector.broadcast %58 : vector<1x64xf32> to vector<64x64xf32>
    %61 = arith.addf %59, %60 : vector<64x64xf32>
    %cst_21 = arith.constant 0.000000e+00 : f32
    %62 = vector.broadcast %cst_21 : f32 to vector<64x64xf32>
    %63 = arith.cmpf ogt, %61, %62 : vector<64x64xf32>
    %cst_22 = arith.constant 2.000000e-01 : f32
    %64 = vector.broadcast %cst_22 : f32 to vector<64x64xf32>
    %65 = arith.mulf %64, %61 : vector<64x64xf32>
    %66 = arith.select %63, %61, %65 : vector<64x64xi1>, vector<64x64xf32>
    %67 = arith.addf %66, %1 : vector<64x64xf32>
    %cst_23 = arith.constant dense<0xFF800000> : vector<64xf32>
    %68 = vector.multi_reduction <maximumf>, %67, %cst_23 [1] : vector<64x64xf32> to vector<64xf32>
    %69 = vector.shape_cast %68 : vector<64xf32> to vector<64x1xf32>
    %70 = vector.broadcast %69 : vector<64x1xf32> to vector<64x64xf32>
    %71 = arith.subf %67, %70 : vector<64x64xf32>
    %72 = math.exp %71 : vector<64x64xf32>
    %cst_24 = arith.constant dense<0.000000e+00> : vector<64xf32>
    %73 = vector.multi_reduction <add>, %72, %cst_24 [1] : vector<64x64xf32> to vector<64xf32>
    %74 = vector.shape_cast %73 : vector<64xf32> to vector<64x1xf32>
    %75 = tpu.reciprocal %74 : vector<64x1xf32> -> vector<64x1xf32>
    %76 = vector.broadcast %75 : vector<64x1xf32> to vector<64x64xf32>
    %77 = arith.mulf %72, %76 : vector<64x64xf32>
    %78 = vector.extract_strided_slice %2 {offsets = [2, 0], sizes = [1, 128], strides = [1, 1]} : vector<4x128xf32> to vector<1x128xf32>
    %79 = vector.broadcast %78 : vector<1x128xf32> to vector<64x128xf32>
    %80 = arith.mulf %4, %79 : vector<64x128xf32>
    %81 = vector.extract_strided_slice %6 {offsets = [0, 3], sizes = [64, 1], strides = [1, 1]} : vector<64x4xf32> to vector<64x1xf32>
    %82 = vector.extract_strided_slice %8 {offsets = [3, 0], sizes = [1, 64], strides = [1, 1]} : vector<4x64xf32> to vector<1x64xf32>
    %83 = vector.broadcast %81 : vector<64x1xf32> to vector<64x64xf32>
    %84 = vector.broadcast %82 : vector<1x64xf32> to vector<64x64xf32>
    %85 = arith.addf %83, %84 : vector<64x64xf32>
    %cst_25 = arith.constant 0.000000e+00 : f32
    %86 = vector.broadcast %cst_25 : f32 to vector<64x64xf32>
    %87 = arith.cmpf ogt, %85, %86 : vector<64x64xf32>
    %cst_26 = arith.constant 2.000000e-01 : f32
    %88 = vector.broadcast %cst_26 : f32 to vector<64x64xf32>
    %89 = arith.mulf %88, %85 : vector<64x64xf32>
    %90 = arith.select %87, %85, %89 : vector<64x64xi1>, vector<64x64xf32>
    %91 = arith.addf %90, %1 : vector<64x64xf32>
    %cst_27 = arith.constant dense<0xFF800000> : vector<64xf32>
    %92 = vector.multi_reduction <maximumf>, %91, %cst_27 [1] : vector<64x64xf32> to vector<64xf32>
    %93 = vector.shape_cast %92 : vector<64xf32> to vector<64x1xf32>
    %94 = vector.broadcast %93 : vector<64x1xf32> to vector<64x64xf32>
    %95 = arith.subf %91, %94 : vector<64x64xf32>
    %96 = math.exp %95 : vector<64x64xf32>
    %cst_28 = arith.constant dense<0.000000e+00> : vector<64xf32>
    %97 = vector.multi_reduction <add>, %96, %cst_28 [1] : vector<64x64xf32> to vector<64xf32>
    %98 = vector.shape_cast %97 : vector<64xf32> to vector<64x1xf32>
    %99 = tpu.reciprocal %98 : vector<64x1xf32> -> vector<64x1xf32>
    %100 = vector.broadcast %99 : vector<64x1xf32> to vector<64x64xf32>
    %101 = arith.mulf %96, %100 : vector<64x64xf32>
    %102 = vector.extract_strided_slice %2 {offsets = [3, 0], sizes = [1, 128], strides = [1, 1]} : vector<4x128xf32> to vector<1x128xf32>
    %103 = vector.broadcast %102 : vector<1x128xf32> to vector<64x128xf32>
    %104 = arith.mulf %4, %103 : vector<64x128xf32>
    %105 = tpu.concatenate %29, %53, %77, %101 in 1 : vector<64x64xf32>, vector<64x64xf32>, vector<64x64xf32>, vector<64x64xf32> -> vector<64x256xf32>
    %106 = tpu.concatenate %32, %56, %80, %104 in 0 : vector<64x128xf32>, vector<64x128xf32>, vector<64x128xf32>, vector<64x128xf32> -> vector<256x128xf32>
    %cst_29 = arith.constant dense<0.000000e+00> : vector<64x128xf32>
    %107 = tpu.matmul %105, %106, %cst_29 {dimension_numbers = #tpu.dot_dimension_numbers<[1], [0], [0], [1], [0, 0, 1, 1], [], []>} : vector<64x256xf32>, vector<256x128xf32>, vector<64x128xf32> -> vector<64x128xf32>
    %c0_30 = arith.constant 0 : index
    %c0_31 = arith.constant 0 : index
    %108 = vector.load %arg5[%c0_30, %c0_31] : memref<1x128xf32, #tpu.memory_space<vmem>>, vector<1x128xf32>
    %109 = vector.broadcast %108 : vector<1x128xf32> to vector<64x128xf32>
    %110 = arith.addf %107, %109 : vector<64x128xf32>
    %c0_32 = arith.constant 0 : index
    %c0_33 = arith.constant 0 : index
    %111 = vector.load %arg7[%c0_32, %c0_33] : memref<128x128xf32, #tpu.memory_space<vmem>>, vector<128x128xf32>
    %cst_34 = arith.constant dense<0.000000e+00> : vector<64x128xf32>
    %112 = tpu.matmul %110, %111, %cst_34 {dimension_numbers = #tpu.dot_dimension_numbers<[1], [0], [0], [1], [0, 0, 1, 1], [], []>} : vector<64x128xf32>, vector<128x128xf32>, vector<64x128xf32> -> vector<64x128xf32>
    %c0_35 = arith.constant 0 : index
    %c0_36 = arith.constant 0 : index
    %113 = vector.load %arg9[%c0_35, %c0_36] : memref<1x128xf32, #tpu.memory_space<vmem>>, vector<1x128xf32>
    %cst_37 = arith.constant dense<0.000000e+00> : vector<64x1xf32>
    %114 = tpu.matmul %112, %113, %cst_37 {dimension_numbers = #tpu.dot_dimension_numbers<[1], [1], [0], [0], [0, 0, 1, 0], [], []>} : vector<64x128xf32>, vector<1x128xf32>, vector<64x1xf32> -> vector<64x1xf32>
    %c0_38 = arith.constant 0 : index
    %c0_39 = arith.constant 0 : index
    %115 = vector.load %arg8[%c0_38, %c0_39] : memref<1x128xf32, #tpu.memory_space<vmem>>, vector<1x128xf32>
    %cst_40 = arith.constant dense<0.000000e+00> : vector<1x64xf32>
    %116 = tpu.matmul %115, %112, %cst_40 {dimension_numbers = #tpu.dot_dimension_numbers<[1], [1], [0], [0], [0, 0, 1, 0], [], []>} : vector<1x128xf32>, vector<64x128xf32>, vector<1x64xf32> -> vector<1x64xf32>
    %117 = vector.broadcast %114 : vector<64x1xf32> to vector<64x64xf32>
    %118 = vector.broadcast %116 : vector<1x64xf32> to vector<64x64xf32>
    %119 = arith.addf %117, %118 : vector<64x64xf32>
    %cst_41 = arith.constant 0.000000e+00 : f32
    %120 = vector.broadcast %cst_41 : f32 to vector<64x64xf32>
    %121 = arith.cmpf ogt, %119, %120 : vector<64x64xf32>
    %cst_42 = arith.constant 2.000000e-01 : f32
    %122 = vector.broadcast %cst_42 : f32 to vector<64x64xf32>
    %123 = arith.mulf %122, %119 : vector<64x64xf32>
    %124 = arith.select %121, %119, %123 : vector<64x64xi1>, vector<64x64xf32>
    %125 = arith.addf %124, %1 : vector<64x64xf32>
    %cst_43 = arith.constant dense<0xFF800000> : vector<64xf32>
    %126 = vector.multi_reduction <maximumf>, %125, %cst_43 [1] : vector<64x64xf32> to vector<64xf32>
    %127 = vector.shape_cast %126 : vector<64xf32> to vector<64x1xf32>
    %128 = vector.broadcast %127 : vector<64x1xf32> to vector<64x64xf32>
    %129 = arith.subf %125, %128 : vector<64x64xf32>
    %130 = math.exp %129 : vector<64x64xf32>
    %cst_44 = arith.constant dense<0.000000e+00> : vector<64xf32>
    %131 = vector.multi_reduction <add>, %130, %cst_44 [1] : vector<64x64xf32> to vector<64xf32>
    %132 = vector.shape_cast %131 : vector<64xf32> to vector<64x1xf32>
    %133 = tpu.reciprocal %132 : vector<64x1xf32> -> vector<64x1xf32>
    %134 = vector.broadcast %133 : vector<64x1xf32> to vector<64x64xf32>
    %135 = arith.mulf %130, %134 : vector<64x64xf32>
    %cst_45 = arith.constant dense<0.000000e+00> : vector<64x128xf32>
    %136 = tpu.matmul %135, %112, %cst_45 {dimension_numbers = #tpu.dot_dimension_numbers<[1], [0], [0], [1], [0, 0, 1, 1], [], []>} : vector<64x64xf32>, vector<64x128xf32>, vector<64x128xf32> -> vector<64x128xf32>
    %c0_46 = arith.constant 0 : index
    %c0_47 = arith.constant 0 : index
    %137 = vector.load %arg10[%c0_46, %c0_47] : memref<1x128xf32, #tpu.memory_space<vmem>>, vector<1x128xf32>
    %138 = vector.broadcast %137 : vector<1x128xf32> to vector<64x128xf32>
    %139 = arith.addf %136, %138 : vector<64x128xf32>
    %c0_48 = arith.constant 0 : index
    %c0_49 = arith.constant 0 : index
    %140 = vector.load %arg11[%c0_48, %c0_49] : memref<64x128xf32, #tpu.memory_space<vmem>>, vector<64x128xf32>
    tpu.vector_store %arg11[%c0_48, %c0_49], %139 {strides = array<i32>} : memref<64x128xf32, #tpu.memory_space<vmem>>, vector<64x128xf32>,
    return
  }
}

</mosaic_0001>

<llo_original>
// kernel: gnn_forward.1
$region0: #{gnn_forward.1}
  #allocation0 [shape = 'u32[]', space=smem, size = 0x4, offset = 0x4, fixed_abs, tag = 'smem constant byte address 0x4 - core index']
  #allocation1 [shape = 'u32[144,128]{1,0:T(1,128)}', space=vmem, size = 0x12000, scoped, tag = 'internal scratch']
  %s0 = inlined_call_operand.vmem [shape: f32[64,16], index: 0, kind: input, shape index: {}]
  %s1 = inlined_call_operand.vmem [shape: f32[64,64], index: 1, kind: input, shape index: {}]
  %s2 = inlined_call_operand.vmem [shape: f32[16,128], index: 2, kind: input, shape index: {}]
  %s3 = inlined_call_operand.vmem [shape: f32[4,128], index: 3, kind: input, shape index: {}]
  %s4 = inlined_call_operand.vmem [shape: f32[4,128], index: 4, kind: input, shape index: {}]
  %s5 = inlined_call_operand.vmem [shape: f32[1,128], index: 5, kind: input, shape index: {}]
  %s6 = inlined_call_operand.vmem [shape: f32[4,128], index: 6, kind: input, shape index: {}]
  %s7 = inlined_call_operand.vmem [shape: f32[128,128], index: 7, kind: input, shape index: {}]
  %s8 = inlined_call_operand.vmem [shape: f32[1,128], index: 8, kind: input, shape index: {}]
  %s9 = inlined_call_operand.vmem [shape: f32[1,128], index: 9, kind: input, shape index: {}]
  %s10 = inlined_call_operand.vmem [shape: f32[1,128], index: 10, kind: input, shape index: {}]
  %s11 = inlined_call_operand.vmem [shape: f32[64,128], index: 11, kind: output, shape index: {}]
  %s12 = sld [smem:[#allocation0]]
  $region54: #{gnn_forward.1} parent=0
    _
  %s14 = ssub.s32 1, %s12
  %s15 = scalar_select 0, %s14, %s12
  // Predicated region
  $region2: #{gnn_forward.1} parent=0 // pred_check
    _
  $region3: #{gnn_forward.1} parent=0 // pred_check_branch
    %17 = sbr.rel (0) target = $region5
  $region4: #{gnn_forward.1} parent=0 // pred_region
    _
  $region5: #{gnn_forward.1} parent=0 // pred_fallthru
    _
  // Predicated region
  $region6: #{gnn_forward.1} parent=0 // pred_check
    _
  $region7: #{gnn_forward.1} parent=0 // pred_check_branch
    %19 = sbr.rel (0) target = $region9
  $region8: #{gnn_forward.1} parent=0 // pred_region
    _
  $region9: #{gnn_forward.1} parent=0 // pred_fallthru
    _
  // Predicated region
  $region10: #{gnn_forward.1} parent=0 // pred_check
    _
  $region11: #{gnn_forward.1} parent=0 // pred_check_branch
    %21 = sbr.rel (0) target = $region13
  $region12: #{gnn_forward.1} parent=0 // pred_region
    _
  $region13: #{gnn_forward.1} parent=0 // pred_fallthru
    _
  // Predicated region
  $region14: #{gnn_forward.1} parent=0 // pred_check
    _
  $region15: #{gnn_forward.1} parent=0 // pred_check_branch
    %23 = sbr.rel (0) target = $region17
  $region16: #{gnn_forward.1} parent=0 // pred_region
    _
  $region17: #{gnn_forward.1} parent=0 // pred_fallthru
    _
  // Predicated region
  $region18: #{gnn_forward.1} parent=0 // pred_check
    _
  $region19: #{gnn_forward.1} parent=0 // pred_check_branch
    %25 = sbr.rel (0) target = $region21
  $region20: #{gnn_forward.1} parent=0 // pred_region
    _
  $region21: #{gnn_forward.1} parent=0 // pred_fallthru
    _
  // Predicated region
  $region22: #{gnn_forward.1} parent=0 // pred_check
    _
  $region23: #{gnn_forward.1} parent=0 // pred_check_branch
    %27 = sbr.rel (0) target = $region25
  $region24: #{gnn_forward.1} parent=0 // pred_region
    _
  $region25: #{gnn_forward.1} parent=0 // pred_fallthru
    _
  // Predicated region
  $region26: #{gnn_forward.1} parent=0 // pred_check
    _
  $region27: #{gnn_forward.1} parent=0 // pred_check_branch
    %29 = sbr.rel (0) target = $region29
  $region28: #{gnn_forward.1} parent=0 // pred_region
    _
  $region29: #{gnn_forward.1} parent=0 // pred_fallthru
    _
  // Predicated region
  $region30: #{gnn_forward.1} parent=0 // pred_check
    _
  $region31: #{gnn_forward.1} parent=0 // pred_check_branch
    %31 = sbr.rel (0) target = $region33
  $region32: #{gnn_forward.1} parent=0 // pred_region
    _
  $region33: #{gnn_forward.1} parent=0 // pred_fallthru
    _
  // Predicated region
  $region34: #{gnn_forward.1} parent=0 // pred_check
    _
  $region35: #{gnn_forward.1} parent=0 // pred_check_branch
    %33 = sbr.rel (0) target = $region37
  $region36: #{gnn_forward.1} parent=0 // pred_region
    _
  $region37: #{gnn_forward.1} parent=0 // pred_fallthru
    _
  // Predicated region
  $region38: #{gnn_forward.1} parent=0 // pred_check
    _
  $region39: #{gnn_forward.1} parent=0 // pred_check_branch
    %35 = sbr.rel (0) target = $region41
  $region40: #{gnn_forward.1} parent=0 // pred_region
    _
  $region41: #{gnn_forward.1} parent=0 // pred_fallthru
    _
  // Predicated region
  $region42: #{gnn_forward.1} parent=0 // pred_check
    _
  $region43: #{gnn_forward.1} parent=0 // pred_check_branch
    %37 = sbr.rel (0) target = $region45
  $region44: #{gnn_forward.1} parent=0 // pred_region
    _
  $region45: #{gnn_forward.1} parent=0 // pred_fallthru
    _
  %v38 = vld [vmem:[%s0] sm:$0xff]
  %v39 = vld [vmem:[%s0 + $0x8] sm:$0xff]
  %v40 = vld [vmem:[%s0 + $0x10] sm:$0xff]
  %v41 = vld [vmem:[%s0 + $0x18] sm:$0xff]
  %v42 = vld [vmem:[%s0 + $0x20] sm:$0xff]
  %v43 = vld [vmem:[%s0 + $0x28] sm:$0xff]
  %v44 = vld [vmem:[%s0 + $0x30] sm:$0xff]
  %v45 = vld [vmem:[%s0 + $0x38] sm:$0xff]
  %v46 = vld [vmem:[%s1] sm:$0xff]
  %v47 = vld [vmem:[%s1 + $0x8] sm:$0xff]
  %v48 = vld [vmem:[%s1 + $0x10] sm:$0xff]
  %v49 = vld [vmem:[%s1 + $0x18] sm:$0xff]
  %v50 = vld [vmem:[%s1 + $0x20] sm:$0xff]
  %v51 = vld [vmem:[%s1 + $0x28] sm:$0xff]
  %v52 = vld [vmem:[%s1 + $0x30] sm:$0xff]
  %v53 = vld [vmem:[%s1 + $0x38] sm:$0xff]
  %v54 = vld [vmem:[%s6] sm:$0xf]
  %v55 = vld [vmem:[%s2] sm:$0xff]
  %v56 = vld [vmem:[%s2 + $0x8] sm:$0xff]
  %vm57 = vcmask 130048
  %v59 = vsel %vm57, %v38, 0
  %v62 = vsel %vm57, %v39, 0
  %v65 = vsel %vm57, %v40, 0
  %v68 = vsel %vm57, %v41, 0
  %v71 = vsel %vm57, %v42, 0
  %v74 = vsel %vm57, %v43, 0
  %v77 = vsel %vm57, %v44, 0
  %v80 = vsel %vm57, %v45, 0
  %82 = vmatprep.subr.mxu0 0.0
  %83 = vmatpush1.msra.mxu0 %v55
  %84 = vmatprep.subr.mxu0 0.0
  %85 = vmatpush1.msra.mxu0 %v56
  %86 = vmatprep.subr.mxu0 0.0
  %87 = vmatpush1.msra.mxu0 0.0
  %88 = vmatprep.subr.mxu0 0.0
  %89 = vmatpush1.msra.mxu0 0.0
  %90 = vmatprep.subr.mxu0 0.0
  %91 = vmatpush1.msra.mxu0 0.0
  %92 = vmatprep.subr.mxu0 0.0
  %93 = vmatpush1.msra.mxu0 0.0
  %94 = vmatprep.subr.mxu0 0.0
  %95 = vmatpush1.msra.mxu0 0.0
  %96 = vmatprep.subr.mxu0 0.0
  %97 = vmatpush1.msra.mxu0 0.0
  %98 = vmatprep.subr.mxu0 0.0
  %99 = vmatpush1.msra.mxu0 0.0
  %100 = vmatprep.subr.mxu0 0.0
  %101 = vmatpush1.msra.mxu0 0.0
  %102 = vmatprep.subr.mxu0 0.0
  %103 = vmatpush1.msra.mxu0 0.0
  %104 = vmatprep.subr.mxu0 0.0
  %105 = vmatpush1.msra.mxu0 0.0
  %106 = vmatprep.subr.mxu0 0.0
  %107 = vmatpush1.msra.mxu0 0.0
  %108 = vmatprep.subr.mxu0 0.0
  %109 = vmatpush1.msra.mxu0 0.0
  %110 = vmatprep.subr.mxu0 0.0
  %111 = vmatpush1.msra.mxu0 0.0
  %112 = vmatprep.subr.mxu0 0.0
  %113 = vmatpush1.msra.mxu0 0.0
  %114 = vmatprep.subr.mxu0 0.0
  %115 = vmatpush1.msra.mxu0 0.0
  %116 = vmatprep.subr.mxu0 0.0
  %117 = vmatpush1.msra.mxu0 0.0
  %118 = vmatprep.subr.mxu0 0.0
  %119 = vmatpush1.msra.mxu0 0.0
  %120 = vmatprep.subr.mxu0 0.0
  %121 = vmatpush1.msra.mxu0 0.0
  %122 = vmatprep.subr.mxu0 0.0
  %123 = vmatpush1.msra.mxu0 0.0
  %124 = vmatprep.subr.mxu0 0.0
  %125 = vmatpush1.msra.mxu0 0.0
  %126 = vmatprep.subr.mxu0 0.0
  %127 = vmatpush1.msra.mxu0 0.0
  %128 = vmatprep.subr.mxu0 0.0
  %129 = vmatpush1.msra.mxu0 0.0
  %130 = vmatprep.subr.mxu0 0.0
  %131 = vmatpush1.msra.mxu0 0.0
  %132 = vmatprep.subr.mxu0 0.0
  %133 = vmatpush1.msra.mxu0 0.0
  %134 = vmatprep.subr.mxu0 0.0
  %135 = vmatpush1.msra.mxu0 0.0
  %136 = vmatprep.subr.mxu0 0.0
  %137 = vmatpush1.msra.mxu0 0.0
  %138 = vmatprep.subr.mxu0 0.0
  %139 = vmatpush1.msra.mxu0 0.0
  %140 = vmatprep.subr.mxu0 0.0
  %141 = vmatpush1.msra.mxu0 0.0
  %142 = vmatprep.subr.mxu0 0.0
  %143 = vmatpush1.msra.mxu0 0.0
  %144 = vmatprep.subr.mxu0 0.0
  %145 = vmatpush1.msra.mxu0 0.0
  %146 = vmatprep.mubr.f32.mxu0 0.0
  %147 = vmatmul.mubr.f32.gmra.mrb[0].mxu0 %v59
  %v148 = vpop.f32.mrb[0].mxu0
  %v149 = vadd.f32 0.0, %v148
  %v150 = vpop.f32.mrb[0].mxu0
  %151 = vmatprep.mubr.f32.mxu0 0.0
  %152 = vmatmul.mubr.f32.gmra.mrb[0].mxu0 %v62
  %v153 = vpop.f32.mrb[0].mxu0
  %v154 = vadd.f32 0.0, %v153
  %v155 = vpop.f32.mrb[0].mxu0
  %156 = vmatprep.mubr.f32.mxu0 0.0
  %157 = vmatmul.mubr.f32.gmra.mrb[0].mxu0 %v65
  %v158 = vpop.f32.mrb[0].mxu0
  %v159 = vadd.f32 0.0, %v158
  %v160 = vpop.f32.mrb[0].mxu0
  %161 = vmatprep.mubr.f32.mxu0 0.0
  %162 = vmatmul.mubr.f32.gmra.mrb[0].mxu0 %v68
  %v163 = vpop.f32.mrb[0].mxu0
  %v164 = vadd.f32 0.0, %v163
  %v165 = vpop.f32.mrb[0].mxu0
  %166 = vmatprep.mubr.f32.mxu0 0.0
  %167 = vmatmul.mubr.f32.gmra.mrb[0].mxu0 %v71
  %v168 = vpop.f32.mrb[0].mxu0
  %v169 = vadd.f32 0.0, %v168
  %v170 = vpop.f32.mrb[0].mxu0
  %171 = vmatprep.mubr.f32.mxu0 0.0
  %172 = vmatmul.mubr.f32.gmra.mrb[0].mxu0 %v74
  %v173 = vpop.f32.mrb[0].mxu0
  %v174 = vadd.f32 0.0, %v173
  %v175 = vpop.f32.mrb[0].mxu0
  %176 = vmatprep.mubr.f32.mxu0 0.0
  %177 = vmatmul.mubr.f32.gmra.mrb[0].mxu0 %v77
  %v178 = vpop.f32.mrb[0].mxu0
  %v179 = vadd.f32 0.0, %v178
  %v180 = vpop.f32.mrb[0].mxu0
  %181 = vmatprep.mubr.f32.mxu0 0.0
  %182 = vmatmul.mubr.f32.gmra.mrb[0].mxu0 %v80
  %v183 = vpop.f32.mrb[0].mxu0
  %v184 = vadd.f32 0.0, %v183
  %v185 = vpop.f32.mrb[0].mxu0
  %186 = vdwg.mxu0
  %v187 = vld [vmem:[%s4] sm:$0xf]
  %188 = vmatprep.subr.mxu0 0.0
  %189 = vmatpush1.xpose.msra.mxu0 %v187
  %190 = vmatprep.subr.mxu0 0.0
  %191 = vmatpush1.xpose.msra.mxu0 0.0
  %192 = vmatprep.subr.mxu0 0.0
  %193 = vmatpush1.xpose.msra.mxu0 0.0
  %194 = vmatprep.subr.mxu0 0.0
  %195 = vmatpush1.xpose.msra.mxu0 0.0
  %196 = vmatprep.subr.mxu0 0.0
  %197 = vmatpush1.xpose.msra.mxu0 0.0
  %198 = vmatprep.subr.mxu0 0.0
  %199 = vmatpush1.xpose.msra.mxu0 0.0
  %200 = vmatprep.subr.mxu0 0.0
  %201 = vmatpush1.xpose.msra.mxu0 0.0
  %202 = vmatprep.subr.mxu0 0.0
  %203 = vmatpush1.xpose.msra.mxu0 0.0
  %204 = vmatprep.subr.mxu0 0.0
  %205 = vmatpush1.xpose.msra.mxu0 0.0
  %206 = vmatprep.subr.mxu0 0.0
  %207 = vmatpush1.xpose.msra.mxu0 0.0
  %208 = vmatprep.subr.mxu0 0.0
  %209 = vmatpush1.xpose.msra.mxu0 0.0
  %210 = vmatprep.subr.mxu0 0.0
  %211 = vmatpush1.xpose.msra.mxu0 0.0
  %212 = vmatprep.subr.mxu0 0.0
  %213 = vmatpush1.xpose.msra.mxu0 0.0
  %214 = vmatprep.subr.mxu0 0.0
  %215 = vmatpush1.xpose.msra.mxu0 0.0
  %216 = vmatprep.subr.mxu0 0.0
  %217 = vmatpush1.xpose.msra.mxu0 0.0
  %218 = vmatprep.subr.mxu0 0.0
  %219 = vmatpush1.xpose.msra.mxu0 0.0
  %220 = vmatprep.subr.mxu0 0.0
  %221 = vmatpush1.xpose.msra.mxu0 0.0
  %222 = vmatprep.subr.mxu0 0.0
  %223 = vmatpush1.xpose.msra.mxu0 0.0
  %224 = vmatprep.subr.mxu0 0.0
  %225 = vmatpush1.xpose.msra.mxu0 0.0
  %226 = vmatprep.subr.mxu0 0.0
  %227 = vmatpush1.xpose.msra.mxu0 0.0
  %228 = vmatprep.subr.mxu0 0.0
  %229 = vmatpush1.xpose.msra.mxu0 0.0
  %230 = vmatprep.subr.mxu0 0.0
  %231 = vmatpush1.xpose.msra.mxu0 0.0
  %232 = vmatprep.subr.mxu0 0.0
  %233 = vmatpush1.xpose.msra.mxu0 0.0
  %234 = vmatprep.subr.mxu0 0.0
  %235 = vmatpush1.xpose.msra.mxu0 0.0
  %236 = vmatprep.subr.mxu0 0.0
  %237 = vmatpush1.xpose.msra.mxu0 0.0
  %238 = vmatprep.subr.mxu0 0.0
  %239 = vmatpush1.xpose.msra.mxu0 0.0
  %240 = vmatprep.subr.mxu0 0.0
  %241 = vmatpush1.xpose.msra.mxu0 0.0
  %242 = vmatprep.subr.mxu0 0.0
  %243 = vmatpush1.xpose.msra.mxu0 0.0
  %244 = vmatprep.subr.mxu0 0.0
  %245 = vmatpush1.xpose.msra.mxu0 0.0
  %246 = vmatprep.subr.mxu0 0.0
  %247 = vmatpush1.xpose.msra.mxu0 0.0
  %248 = vmatprep.subr.mxu0 0.0
  %249 = vmatpush1.xpose.msra.mxu0 0.0
  %250 = vmatprep.subr.mxu0 0.0
  %251 = vmatpush1.xpose.msra.mxu0 0.0
  %252 = vmatprep.mubr.f32.mxu0 0.0
  %253 = vmatmul.mubr.f32.gmra.mrb[0].mxu0 %v149
  %v254 = vpop.f32.mrb[0].mxu0
  %v255 = vadd.f32 0.0, %v254
  %v256 = vpop.f32.mrb[0].mxu0
  %257 = vmatprep.mubr.f32.mxu0 0.0
  %258 = vmatmul.mubr.f32.gmra.mrb[0].mxu0 %v154
  %v259 = vpop.f32.mrb[0].mxu0
  %v260 = vadd.f32 0.0, %v259
  %v261 = vpop.f32.mrb[0].mxu0
  %262 = vmatprep.mubr.f32.mxu0 0.0
  %263 = vmatmul.mubr.f32.gmra.mrb[0].mxu0 %v159
  %v264 = vpop.f32.mrb[0].mxu0
  %v265 = vadd.f32 0.0, %v264
  %v266 = vpop.f32.mrb[0].mxu0
  %267 = vmatprep.mubr.f32.mxu0 0.0
  %268 = vmatmul.mubr.f32.gmra.mrb[0].mxu0 %v164
  %v269 = vpop.f32.mrb[0].mxu0
  %v270 = vadd.f32 0.0, %v269
  %v271 = vpop.f32.mrb[0].mxu0
  %272 = vmatprep.mubr.f32.mxu0 0.0
  %273 = vmatmul.mubr.f32.gmra.mrb[0].mxu0 %v169
  %v274 = vpop.f32.mrb[0].mxu0
  %v275 = vadd.f32 0.0, %v274
  %v276 = vpop.f32.mrb[0].mxu0
  %277 = vmatprep.mubr.f32.mxu0 0.0
  %278 = vmatmul.mubr.f32.gmra.mrb[0].mxu0 %v174
  %v279 = vpop.f32.mrb[0].mxu0
  %v280 = vadd.f32 0.0, %v279
  %v281 = vpop.f32.mrb[0].mxu0
  %282 = vmatprep.mubr.f32.mxu0 0.0
  %283 = vmatmul.mubr.f32.gmra.mrb[0].mxu0 %v179
  %v284 = vpop.f32.mrb[0].mxu0
  %v285 = vadd.f32 0.0, %v284
  %v286 = vpop.f32.mrb[0].mxu0
  %287 = vmatprep.mubr.f32.mxu0 0.0
  %288 = vmatmul.mubr.f32.gmra.mrb[0].mxu0 %v184
  %v289 = vpop.f32.mrb[0].mxu0
  %v290 = vadd.f32 0.0, %v289
  %v291 = vpop.f32.mrb[0].mxu0
  %292 = vdwg.mxu0
  %v293 = vld [vmem:[%s3] sm:$0xf]
  %294 = vmatprep.subr.mxu0 0.0
  %295 = vmatpush1.xpose.msra.mxu0 %v149
  %296 = vmatprep.subr.mxu0 0.0
  %297 = vmatpush1.xpose.msra.mxu0 %v154
  %298 = vmatprep.subr.mxu0 0.0
  %299 = vmatpush1.xpose.msra.mxu0 %v159
  %300 = vmatprep.subr.mxu0 0.0
  %301 = vmatpush1.xpose.msra.mxu0 %v164
  %302 = vmatprep.subr.mxu0 0.0
  %303 = vmatpush1.xpose.msra.mxu0 %v169
  %304 = vmatprep.subr.mxu0 0.0
  %305 = vmatpush1.xpose.msra.mxu0 %v174
  %306 = vmatprep.subr.mxu0 0.0
  %307 = vmatpush1.xpose.msra.mxu0 %v179
  %308 = vmatprep.subr.mxu0 0.0
  %309 = vmatpush1.xpose.msra.mxu0 %v184
  %310 = vmatprep.subr.mxu0 0.0
  %311 = vmatpush1.xpose.msra.mxu0 0.0
  %312 = vmatprep.subr.mxu0 0.0
  %313 = vmatpush1.xpose.msra.mxu0 0.0
  %314 = vmatprep.subr.mxu0 0.0
  %315 = vmatpush1.xpose.msra.mxu0 0.0
  %316 = vmatprep.subr.mxu0 0.0
  %317 = vmatpush1.xpose.msra.mxu0 0.0
  %318 = vmatprep.subr.mxu0 0.0
  %319 = vmatpush1.xpose.msra.mxu0 0.0
  %320 = vmatprep.subr.mxu0 0.0
  %321 = vmatpush1.xpose.msra.mxu0 0.0
  %322 = vmatprep.subr.mxu0 0.0
  %323 = vmatpush1.xpose.msra.mxu0 0.0
  %324 = vmatprep.subr.mxu0 0.0
  %325 = vmatpush1.xpose.msra.mxu0 0.0
  %326 = vmatprep.subr.mxu0 0.0
  %327 = vmatpush1.xpose.msra.mxu0 0.0
  %328 = vmatprep.subr.mxu0 0.0
  %329 = vmatpush1.xpose.msra.mxu0 0.0
  %330 = vmatprep.subr.mxu0 0.0
  %331 = vmatpush1.xpose.msra.mxu0 0.0
  %332 = vmatprep.subr.mxu0 0.0
  %333 = vmatpush1.xpose.msra.mxu0 0.0
  %334 = vmatprep.subr.mxu0 0.0
  %335 = vmatpush1.xpose.msra.mxu0 0.0
  %336 = vmatprep.subr.mxu0 0.0
  %337 = vmatpush1.xpose.msra.mxu0 0.0
  %338 = vmatprep.subr.mxu0 0.0
  %339 = vmatpush1.xpose.msra.mxu0 0.0
  %340 = vmatprep.subr.mxu0 0.0
  %341 = vmatpush1.xpose.msra.mxu0 0.0
  %342 = vmatprep.subr.mxu0 0.0
  %343 = vmatpush1.xpose.msra.mxu0 0.0
  %344 = vmatprep.subr.mxu0 0.0
  %345 = vmatpush1.xpose.msra.mxu0 0.0
  %346 = vmatprep.subr.mxu0 0.0
  %347 = vmatpush1.xpose.msra.mxu0 0.0
  %348 = vmatprep.subr.mxu0 0.0
  %349 = vmatpush1.xpose.msra.mxu0 0.0
  %350 = vmatprep.subr.mxu0 0.0
  %351 = vmatpush1.xpose.msra.mxu0 0.0
  %352 = vmatprep.subr.mxu0 0.0
  %353 = vmatpush1.xpose.msra.mxu0 0.0
  %354 = vmatprep.subr.mxu0 0.0
  %355 = vmatpush1.xpose.msra.mxu0 0.0
  %356 = vmatprep.subr.mxu0 0.0
  %357 = vmatpush1.xpose.msra.mxu0 0.0
  %358 = vmatprep.mubr.f32.mxu0 0.0
  %359 = vmatmul.mubr.f32.gmra.mrb[0].mxu0 %v293
  %v360 = vpop.f32.mrb[0].mxu0
  %v361 = vadd.f32 0.0, %v360
  %v362 = vpop.f32.mrb[0].mxu0
  %363 = vdwg.mxu0
  %365 = vset.pattern.permute.xlu0 0
  %366 = vperm.xlu0 %365, %v255
  %v367 = vpop.permute.xlu0 %366
  %370 = vset.pattern.permute.xlu0 0
  %371 = vperm.xlu0 %370, %v260
  %v372 = vpop.permute.xlu0 %371
  %375 = vset.pattern.permute.xlu0 0
  %376 = vperm.xlu0 %375, %v265
  %v377 = vpop.permute.xlu0 %376
  %380 = vset.pattern.permute.xlu0 0
  %381 = vperm.xlu0 %380, %v270
  %v382 = vpop.permute.xlu0 %381
  %385 = vset.pattern.permute.xlu0 0
  %386 = vperm.xlu0 %385, %v275
  %v387 = vpop.permute.xlu0 %386
  %390 = vset.pattern.permute.xlu0 0
  %391 = vperm.xlu0 %390, %v280
  %v392 = vpop.permute.xlu0 %391
  %395 = vset.pattern.permute.xlu0 0
  %396 = vperm.xlu0 %395, %v285
  %v397 = vpop.permute.xlu0 %396
  %400 = vset.pattern.permute.xlu0 0
  %401 = vperm.xlu0 %400, %v290
  %v402 = vpop.permute.xlu0 %401
  %v404 = vlaneseq
  %v405 = vshrl.u32 %v404, 7
  %v406 = vsub.s32 0, %v405
  %v407 = vrot.slane %v361, %v406
  %v408 = vadd.f32 %v367, %v407
  %v409 = vadd.f32 %v372, %v407
  %v410 = vadd.f32 %v377, %v407
  %v411 = vadd.f32 %v382, %v407
  %v412 = vadd.f32 %v387, %v407
  %v413 = vadd.f32 %v392, %v407
  %v414 = vadd.f32 %v397, %v407
  %v415 = vadd.f32 %v402, %v407
  %vm416 = vcmp.gt.f32.partialorder %v408, 0.0
  %vm417 = vcmp.gt.f32.partialorder %v409, 0.0
  %vm418 = vcmp.gt.f32.partialorder %v410, 0.0
  %vm419 = vcmp.gt.f32.partialorder %v411, 0.0
  %vm420 = vcmp.gt.f32.partialorder %v412, 0.0
  %vm421 = vcmp.gt.f32.partialorder %v413, 0.0
  %vm422 = vcmp.gt.f32.partialorder %v414, 0.0
  %vm423 = vcmp.gt.f32.partialorder %v415, 0.0
  %v424 = vmul.f32 %v408, 0.2
  %v425 = vmul.f32 %v409, 0.2
  %v426 = vmul.f32 %v410, 0.2
  %v427 = vmul.f32 %v411, 0.2
  %v428 = vmul.f32 %v412, 0.2
  %v429 = vmul.f32 %v413, 0.2
  %v430 = vmul.f32 %v414, 0.2
  %v431 = vmul.f32 %v415, 0.2
  %v432 = vsel %vm416, %v408, %v424
  %v433 = vsel %vm417, %v409, %v425
  %v434 = vsel %vm418, %v410, %v426
  %v435 = vsel %vm419, %v411, %v427
  %v436 = vsel %vm420, %v412, %v428
  %v437 = vsel %vm421, %v413, %v429
  %v438 = vsel %vm422, %v414, %v430
  %v439 = vsel %vm423, %v415, %v431
  %v440 = vadd.f32 %v432, %v46
  %v441 = vadd.f32 %v433, %v47
  %v442 = vadd.f32 %v434, %v48
  %v443 = vadd.f32 %v435, %v49
  %v444 = vadd.f32 %v436, %v50
  %v445 = vadd.f32 %v437, %v51
  %v446 = vadd.f32 %v438, %v52
  %v447 = vadd.f32 %v439, %v53
  %vm448 = vcmask 523264
  %v449 = vsel %vm448, %v440, -inf
  %450 = vmax.xlane.f32.xlu0 %v449
  %v451 = vpop.xlane.xlu0 %450
  %v452 = vsel %vm448, %v441, -inf
  %453 = vmax.xlane.f32.xlu0 %v452
  %v454 = vpop.xlane.xlu0 %453
  %v455 = vsel %vm448, %v442, -inf
  %456 = vmax.xlane.f32.xlu0 %v455
  %v457 = vpop.xlane.xlu0 %456
  %v458 = vsel %vm448, %v443, -inf
  %459 = vmax.xlane.f32.xlu0 %v458
  %v460 = vpop.xlane.xlu0 %459
  %v461 = vsel %vm448, %v444, -inf
  %462 = vmax.xlane.f32.xlu0 %v461
  %v463 = vpop.xlane.xlu0 %462
  %v464 = vsel %vm448, %v445, -inf
  %465 = vmax.xlane.f32.xlu0 %v464
  %v466 = vpop.xlane.xlu0 %465
  %v467 = vsel %vm448, %v446, -inf
  %468 = vmax.xlane.f32.xlu0 %v467
  %v469 = vpop.xlane.xlu0 %468
  %v470 = vsel %vm448, %v447, -inf
  %471 = vmax.xlane.f32.xlu0 %v470
  %v472 = vpop.xlane.xlu0 %471
  %v473 = vsub.f32 %v440, %v451
  %v474 = vsub.f32 %v441, %v454
  %v475 = vsub.f32 %v442, %v457
  %v476 = vsub.f32 %v443, %v460
  %v477 = vsub.f32 %v444, %v463
  %v478 = vsub.f32 %v445, %v466
  %v479 = vsub.f32 %v446, %v469
  %v480 = vsub.f32 %v447, %v472
  %v481 = vmul.f32 %v473, 1.442695
  %v482 = vpow.pop %v481
  %v483 = vmul.f32 %v474, 1.442695
  %v484 = vpow.pop %v483
  %v485 = vmul.f32 %v475, 1.442695
  %v486 = vpow.pop %v485
  %v487 = vmul.f32 %v476, 1.442695
  %v488 = vpow.pop %v487
  %v489 = vmul.f32 %v477, 1.442695
  %v490 = vpow.pop %v489
  %v491 = vmul.f32 %v478, 1.442695
  %v492 = vpow.pop %v491
  %v493 = vmul.f32 %v479, 1.442695
  %v494 = vpow.pop %v493
  %v495 = vmul.f32 %v480, 1.442695
  %v496 = vpow.pop %v495
  %v497 = vsel %vm448, %v482, 0.0
  %498 = vadd.xlane.f32.xlu0 %v497
  %v499 = vpop.xlane.xlu0 %498
  %v500 = vsel %vm448, %v484, 0.0
  %501 = vadd.xlane.f32.xlu0 %v500
  %v502 = vpop.xlane.xlu0 %501
  %v503 = vsel %vm448, %v486, 0.0
  %504 = vadd.xlane.f32.xlu0 %v503
  %v505 = vpop.xlane.xlu0 %504
  %v506 = vsel %vm448, %v488, 0.0
  %507 = vadd.xlane.f32.xlu0 %v506
  %v508 = vpop.xlane.xlu0 %507
  %v509 = vsel %vm448, %v490, 0.0
  %510 = vadd.xlane.f32.xlu0 %v509
  %v511 = vpop.xlane.xlu0 %510
  %v512 = vsel %vm448, %v492, 0.0
  %513 = vadd.xlane.f32.xlu0 %v512
  %v514 = vpop.xlane.xlu0 %513
  %v515 = vsel %vm448, %v494, 0.0
  %516 = vadd.xlane.f32.xlu0 %v515
  %v517 = vpop.xlane.xlu0 %516
  %v518 = vsel %vm448, %v496, 0.0
  %519 = vadd.xlane.f32.xlu0 %v518
  %v520 = vpop.xlane.xlu0 %519
  %v521 = vrcp.pop %v499
  %v522 = vrcp.pop %v502
  %v523 = vrcp.pop %v505
  %v524 = vrcp.pop %v508
  %v525 = vrcp.pop %v511
  %v526 = vrcp.pop %v514
  %v527 = vrcp.pop %v517
  %v528 = vrcp.pop %v520
  %v529 = vmul.f32 %v482, %v521
  %v530 = vmul.f32 %v484, %v522
  %v531 = vmul.f32 %v486, %v523
  %v532 = vmul.f32 %v488, %v524
  %v533 = vmul.f32 %v490, %v525
  %v534 = vmul.f32 %v492, %v526
  %v535 = vmul.f32 %v494, %v527
  %v536 = vmul.f32 %v496, %v528
  %v537 = vlaneseq
  %v538 = vshrl.u32 %v537, 7
  %v539 = vsub.s32 0, %v538
  %v540 = vrot.slane %v54, %v539
  %v541 = vmul.f32 %v149, %v540
  %v542 = vmul.f32 %v154, %v540
  %v543 = vmul.f32 %v159, %v540
  %v544 = vmul.f32 %v164, %v540
  %v545 = vmul.f32 %v169, %v540
  %v546 = vmul.f32 %v174, %v540
  %v547 = vmul.f32 %v179, %v540
  %v548 = vmul.f32 %v184, %v540
  %549 = vset.pattern.permute.xlu0 1
  %550 = vperm.xlu0 %549, %v255
  %v551 = vpop.permute.xlu0 %550
  %553 = vset.pattern.permute.xlu0 1
  %554 = vperm.xlu0 %553, %v260
  %v555 = vpop.permute.xlu0 %554
  %557 = vset.pattern.permute.xlu0 1
  %558 = vperm.xlu0 %557, %v265
  %v559 = vpop.permute.xlu0 %558
  %561 = vset.pattern.permute.xlu0 1
  %562 = vperm.xlu0 %561, %v270
  %v563 = vpop.permute.xlu0 %562
  %565 = vset.pattern.permute.xlu0 1
  %566 = vperm.xlu0 %565, %v275
  %v567 = vpop.permute.xlu0 %566
  %569 = vset.pattern.permute.xlu0 1
  %570 = vperm.xlu0 %569, %v280
  %v571 = vpop.permute.xlu0 %570
  %573 = vset.pattern.permute.xlu0 1
  %574 = vperm.xlu0 %573, %v285
  %v575 = vpop.permute.xlu0 %574
  %577 = vset.pattern.permute.xlu0 1
  %578 = vperm.xlu0 %577, %v290
  %v579 = vpop.permute.xlu0 %578
  %v581 = vlaneseq
  %v582 = vshrl.u32 %v581, 7
  %v583 = vsub.s32 1, %v582
  %v584 = vrot.slane %v361, %v583
  %v585 = vadd.f32 %v551, %v584
  %v586 = vadd.f32 %v555, %v584
  %v587 = vadd.f32 %v559, %v584
  %v588 = vadd.f32 %v563, %v584
  %v589 = vadd.f32 %v567, %v584
  %v590 = vadd.f32 %v571, %v584
  %v591 = vadd.f32 %v575, %v584
  %v592 = vadd.f32 %v579, %v584
  %vm593 = vcmp.gt.f32.partialorder %v585, 0.0
  %vm594 = vcmp.gt.f32.partialorder %v586, 0.0
  %vm595 = vcmp.gt.f32.partialorder %v587, 0.0
  %vm596 = vcmp.gt.f32.partialorder %v588, 0.0
  %vm597 = vcmp.gt.f32.partialorder %v589, 0.0
  %vm598 = vcmp.gt.f32.partialorder %v590, 0.0
  %vm599 = vcmp.gt.f32.partialorder %v591, 0.0
  %vm600 = vcmp.gt.f32.partialorder %v592, 0.0
  %v601 = vmul.f32 %v585, 0.2
  %v602 = vmul.f32 %v586, 0.2
  %v603 = vmul.f32 %v587, 0.2
  %v604 = vmul.f32 %v588, 0.2
  %v605 = vmul.f32 %v589, 0.2
  %v606 = vmul.f32 %v590, 0.2
  %v607 = vmul.f32 %v591, 0.2
  %v608 = vmul.f32 %v592, 0.2
  %v609 = vsel %vm593, %v585, %v601
  %v610 = vsel %vm594, %v586, %v602
  %v611 = vsel %vm595, %v587, %v603
  %v612 = vsel %vm596, %v588, %v604
  %v613 = vsel %vm597, %v589, %v605
  %v614 = vsel %vm598, %v590, %v606
  %v615 = vsel %vm599, %v591, %v607
  %v616 = vsel %vm600, %v592, %v608
  %v617 = vadd.f32 %v609, %v46
  %v618 = vadd.f32 %v610, %v47
  %v619 = vadd.f32 %v611, %v48
  %v620 = vadd.f32 %v612, %v49
  %v621 = vadd.f32 %v613, %v50
  %v622 = vadd.f32 %v614, %v51
  %v623 = vadd.f32 %v615, %v52
  %v624 = vadd.f32 %v616, %v53
  %v625 = vsel %vm448, %v617, -inf
  %626 = vmax.xlane.f32.xlu0 %v625
  %v627 = vpop.xlane.xlu0 %626
  %v628 = vsel %vm448, %v618, -inf
  %629 = vmax.xlane.f32.xlu0 %v628
  %v630 = vpop.xlane.xlu0 %629
  %v631 = vsel %vm448, %v619, -inf
  %632 = vmax.xlane.f32.xlu0 %v631
  %v633 = vpop.xlane.xlu0 %632
  %v634 = vsel %vm448, %v620, -inf
  %635 = vmax.xlane.f32.xlu0 %v634
  %v636 = vpop.xlane.xlu0 %635
  %v637 = vsel %vm448, %v621, -inf
  %638 = vmax.xlane.f32.xlu0 %v637
  %v639 = vpop.xlane.xlu0 %638
  %v640 = vsel %vm448, %v622, -inf
  %641 = vmax.xlane.f32.xlu0 %v640
  %v642 = vpop.xlane.xlu0 %641
  %v643 = vsel %vm448, %v623, -inf
  %644 = vmax.xlane.f32.xlu0 %v643
  %v645 = vpop.xlane.xlu0 %644
  %v646 = vsel %vm448, %v624, -inf
  %647 = vmax.xlane.f32.xlu0 %v646
  %v648 = vpop.xlane.xlu0 %647
  %v649 = vsub.f32 %v617, %v627
  %v650 = vsub.f32 %v618, %v630
  %v651 = vsub.f32 %v619, %v633
  %v652 = vsub.f32 %v620, %v636
  %v653 = vsub.f32 %v621, %v639
  %v654 = vsub.f32 %v622, %v642
  %v655 = vsub.f32 %v623, %v645
  %v656 = vsub.f32 %v624, %v648
  %v657 = vmul.f32 %v649, 1.442695
  %v658 = vpow.pop %v657
  %v659 = vmul.f32 %v650, 1.442695
  %v660 = vpow.pop %v659
  %v661 = vmul.f32 %v651, 1.442695
  %v662 = vpow.pop %v661
  %v663 = vmul.f32 %v652, 1.442695
  %v664 = vpow.pop %v663
  %v665 = vmul.f32 %v653, 1.442695
  %v666 = vpow.pop %v665
  %v667 = vmul.f32 %v654, 1.442695
  %v668 = vpow.pop %v667
  %v669 = vmul.f32 %v655, 1.442695
  %v670 = vpow.pop %v669
  %v671 = vmul.f32 %v656, 1.442695
  %v672 = vpow.pop %v671
  %v673 = vsel %vm448, %v658, 0.0
  %674 = vadd.xlane.f32.xlu0 %v673
  %v675 = vpop.xlane.xlu0 %674
  %v676 = vsel %vm448, %v660, 0.0
  %677 = vadd.xlane.f32.xlu0 %v676
  %v678 = vpop.xlane.xlu0 %677
  %v679 = vsel %vm448, %v662, 0.0
  %680 = vadd.xlane.f32.xlu0 %v679
  %v681 = vpop.xlane.xlu0 %680
  %v682 = vsel %vm448, %v664, 0.0
  %683 = vadd.xlane.f32.xlu0 %v682
  %v684 = vpop.xlane.xlu0 %683
  %v685 = vsel %vm448, %v666, 0.0
  %686 = vadd.xlane.f32.xlu0 %v685
  %v687 = vpop.xlane.xlu0 %686
  %v688 = vsel %vm448, %v668, 0.0
  %689 = vadd.xlane.f32.xlu0 %v688
  %v690 = vpop.xlane.xlu0 %689
  %v691 = vsel %vm448, %v670, 0.0
  %692 = vadd.xlane.f32.xlu0 %v691
  %v693 = vpop.xlane.xlu0 %692
  %v694 = vsel %vm448, %v672, 0.0
  %695 = vadd.xlane.f32.xlu0 %v694
  %v696 = vpop.xlane.xlu0 %695
  %v697 = vrcp.pop %v675
  %v698 = vrcp.pop %v678
  %v699 = vrcp.pop %v681
  %v700 = vrcp.pop %v684
  %v701 = vrcp.pop %v687
  %v702 = vrcp.pop %v690
  %v703 = vrcp.pop %v693
  %v704 = vrcp.pop %v696
  %v705 = vmul.f32 %v658, %v697
  %v706 = vmul.f32 %v660, %v698
  %v707 = vmul.f32 %v662, %v699
  %v708 = vmul.f32 %v664, %v700
  %v709 = vmul.f32 %v666, %v701
  %v710 = vmul.f32 %v668, %v702
  %v711 = vmul.f32 %v670, %v703
  %v712 = vmul.f32 %v672, %v704
  %v713 = vlaneseq
  %v714 = vshrl.u32 %v713, 7
  %v715 = vsub.s32 1, %v714
  %v716 = vrot.slane %v54, %v715
  %v717 = vmul.f32 %v149, %v716
  %v718 = vmul.f32 %v154, %v716
  %v719 = vmul.f32 %v159, %v716
  %v720 = vmul.f32 %v164, %v716
  %v721 = vmul.f32 %v169, %v716
  %v722 = vmul.f32 %v174, %v716
  %v723 = vmul.f32 %v179, %v716
  %v724 = vmul.f32 %v184, %v716
  %725 = vset.pattern.permute.xlu0 2
  %726 = vperm.xlu0 %725, %v255
  %v727 = vpop.permute.xlu0 %726
  %729 = vset.pattern.permute.xlu0 2
  %730 = vperm.xlu0 %729, %v260
  %v731 = vpop.permute.xlu0 %730
  %733 = vset.pattern.permute.xlu0 2
  %734 = vperm.xlu0 %733, %v265
  %v735 = vpop.permute.xlu0 %734
  %737 = vset.pattern.permute.xlu0 2
  %738 = vperm.xlu0 %737, %v270
  %v739 = vpop.permute.xlu0 %738
  %741 = vset.pattern.permute.xlu0 2
  %742 = vperm.xlu0 %741, %v275
  %v743 = vpop.permute.xlu0 %742
  %745 = vset.pattern.permute.xlu0 2
  %746 = vperm.xlu0 %745, %v280
  %v747 = vpop.permute.xlu0 %746
  %749 = vset.pattern.permute.xlu0 2
  %750 = vperm.xlu0 %749, %v285
  %v751 = vpop.permute.xlu0 %750
  %753 = vset.pattern.permute.xlu0 2
  %754 = vperm.xlu0 %753, %v290
  %v755 = vpop.permute.xlu0 %754
  %v757 = vlaneseq
  %v758 = vshrl.u32 %v757, 7
  %v759 = vsub.s32 2, %v758
  %v760 = vrot.slane %v361, %v759
  %v761 = vadd.f32 %v727, %v760
  %v762 = vadd.f32 %v731, %v760
  %v763 = vadd.f32 %v735, %v760
  %v764 = vadd.f32 %v739, %v760
  %v765 = vadd.f32 %v743, %v760
  %v766 = vadd.f32 %v747, %v760
  %v767 = vadd.f32 %v751, %v760
  %v768 = vadd.f32 %v755, %v760
  %vm769 = vcmp.gt.f32.partialorder %v761, 0.0
  %vm770 = vcmp.gt.f32.partialorder %v762, 0.0
  %vm771 = vcmp.gt.f32.partialorder %v763, 0.0
  %vm772 = vcmp.gt.f32.partialorder %v764, 0.0
  %vm773 = vcmp.gt.f32.partialorder %v765, 0.0
  %vm774 = vcmp.gt.f32.partialorder %v766, 0.0
  %vm775 = vcmp.gt.f32.partialorder %v767, 0.0
  %vm776 = vcmp.gt.f32.partialorder %v768, 0.0
  %v777 = vmul.f32 %v761, 0.2
  %v778 = vmul.f32 %v762, 0.2
  %v779 = vmul.f32 %v763, 0.2
  %v780 = vmul.f32 %v764, 0.2
  %v781 = vmul.f32 %v765, 0.2
  %v782 = vmul.f32 %v766, 0.2
  %v783 = vmul.f32 %v767, 0.2
  %v784 = vmul.f32 %v768, 0.2
  %v785 = vsel %vm769, %v761, %v777
  %v786 = vsel %vm770, %v762, %v778
  %v787 = vsel %vm771, %v763, %v779
  %v788 = vsel %vm772, %v764, %v780
  %v789 = vsel %vm773, %v765, %v781
  %v790 = vsel %vm774, %v766, %v782
  %v791 = vsel %vm775, %v767, %v783
  %v792 = vsel %vm776, %v768, %v784
  %v793 = vadd.f32 %v785, %v46
  %v794 = vadd.f32 %v786, %v47
  %v795 = vadd.f32 %v787, %v48
  %v796 = vadd.f32 %v788, %v49
  %v797 = vadd.f32 %v789, %v50
  %v798 = vadd.f32 %v790, %v51
  %v799 = vadd.f32 %v791, %v52
  %v800 = vadd.f32 %v792, %v53
  %v801 = vsel %vm448, %v793, -inf
  %802 = vmax.xlane.f32.xlu0 %v801
  %v803 = vpop.xlane.xlu0 %802
  %v804 = vsel %vm448, %v794, -inf
  %805 = vmax.xlane.f32.xlu0 %v804
  %v806 = vpop.xlane.xlu0 %805
  %v807 = vsel %vm448, %v795, -inf
  %808 = vmax.xlane.f32.xlu0 %v807
  %v809 = vpop.xlane.xlu0 %808
  %v810 = vsel %vm448, %v796, -inf
  %811 = vmax.xlane.f32.xlu0 %v810
  %v812 = vpop.xlane.xlu0 %811
  %v813 = vsel %vm448, %v797, -inf
  %814 = vmax.xlane.f32.xlu0 %v813
  %v815 = vpop.xlane.xlu0 %814
  %v816 = vsel %vm448, %v798, -inf
  %817 = vmax.xlane.f32.xlu0 %v816
  %v818 = vpop.xlane.xlu0 %817
  %v819 = vsel %vm448, %v799, -inf
  %820 = vmax.xlane.f32.xlu0 %v819
  %v821 = vpop.xlane.xlu0 %820
  %v822 = vsel %vm448, %v800, -inf
  %823 = vmax.xlane.f32.xlu0 %v822
  %v824 = vpop.xlane.xlu0 %823
  %v825 = vsub.f32 %v793, %v803
  %v826 = vsub.f32 %v794, %v806
  %v827 = vsub.f32 %v795, %v809
  %v828 = vsub.f32 %v796, %v812
  %v829 = vsub.f32 %v797, %v815
  %v830 = vsub.f32 %v798, %v818
  %v831 = vsub.f32 %v799, %v821
  %v832 = vsub.f32 %v800, %v824
  %v833 = vmul.f32 %v825, 1.442695
  %v834 = vpow.pop %v833
  %v835 = vmul.f32 %v826, 1.442695
  %v836 = vpow.pop %v835
  %v837 = vmul.f32 %v827, 1.442695
  %v838 = vpow.pop %v837
  %v839 = vmul.f32 %v828, 1.442695
  %v840 = vpow.pop %v839
  %v841 = vmul.f32 %v829, 1.442695
  %v842 = vpow.pop %v841
  %v843 = vmul.f32 %v830, 1.442695
  %v844 = vpow.pop %v843
  %v845 = vmul.f32 %v831, 1.442695
  %v846 = vpow.pop %v845
  %v847 = vmul.f32 %v832, 1.442695
  %v848 = vpow.pop %v847
  %v849 = vsel %vm448, %v834, 0.0
  %850 = vadd.xlane.f32.xlu0 %v849
  %v851 = vpop.xlane.xlu0 %850
  %v852 = vsel %vm448, %v836, 0.0
  %853 = vadd.xlane.f32.xlu0 %v852
  %v854 = vpop.xlane.xlu0 %853
  %v855 = vsel %vm448, %v838, 0.0
  %856 = vadd.xlane.f32.xlu0 %v855
  %v857 = vpop.xlane.xlu0 %856
  %v858 = vsel %vm448, %v840, 0.0
  %859 = vadd.xlane.f32.xlu0 %v858
  %v860 = vpop.xlane.xlu0 %859
  %v861 = vsel %vm448, %v842, 0.0
  %862 = vadd.xlane.f32.xlu0 %v861
  %v863 = vpop.xlane.xlu0 %862
  %v864 = vsel %vm448, %v844, 0.0
  %865 = vadd.xlane.f32.xlu0 %v864
  %v866 = vpop.xlane.xlu0 %865
  %v867 = vsel %vm448, %v846, 0.0
  %868 = vadd.xlane.f32.xlu0 %v867
  %v869 = vpop.xlane.xlu0 %868
  %v870 = vsel %vm448, %v848, 0.0
  %871 = vadd.xlane.f32.xlu0 %v870
  %v872 = vpop.xlane.xlu0 %871
  %v873 = vrcp.pop %v851
  %v874 = vrcp.pop %v854
  %v875 = vrcp.pop %v857
  %v876 = vrcp.pop %v860
  %v877 = vrcp.pop %v863
  %v878 = vrcp.pop %v866
  %v879 = vrcp.pop %v869
  %v880 = vrcp.pop %v872
  %v881 = vmul.f32 %v834, %v873
  %v882 = vmul.f32 %v836, %v874
  %v883 = vmul.f32 %v838, %v875
  %v884 = vmul.f32 %v840, %v876
  %v885 = vmul.f32 %v842, %v877
  %v886 = vmul.f32 %v844, %v878
  %v887 = vmul.f32 %v846, %v879
  %v888 = vmul.f32 %v848, %v880
  %v889 = vlaneseq
  %v890 = vshrl.u32 %v889, 7
  %v891 = vsub.s32 2, %v890
  %v892 = vrot.slane %v54, %v891
  %v893 = vmul.f32 %v149, %v892
  %v894 = vmul.f32 %v154, %v892
  %v895 = vmul.f32 %v159, %v892
  %v896 = vmul.f32 %v164, %v892
  %v897 = vmul.f32 %v169, %v892
  %v898 = vmul.f32 %v174, %v892
  %v899 = vmul.f32 %v179, %v892
  %v900 = vmul.f32 %v184, %v892
  %901 = vset.pattern.permute.xlu0 3
  %902 = vperm.xlu0 %901, %v255
  %v903 = vpop.permute.xlu0 %902
  %905 = vset.pattern.permute.xlu0 3
  %906 = vperm.xlu0 %905, %v260
  %v907 = vpop.permute.xlu0 %906
  %909 = vset.pattern.permute.xlu0 3
  %910 = vperm.xlu0 %909, %v265
  %v911 = vpop.permute.xlu0 %910
  %913 = vset.pattern.permute.xlu0 3
  %914 = vperm.xlu0 %913, %v270
  %v915 = vpop.permute.xlu0 %914
  %917 = vset.pattern.permute.xlu0 3
  %918 = vperm.xlu0 %917, %v275
  %v919 = vpop.permute.xlu0 %918
  %921 = vset.pattern.permute.xlu0 3
  %922 = vperm.xlu0 %921, %v280
  %v923 = vpop.permute.xlu0 %922
  %925 = vset.pattern.permute.xlu0 3
  %926 = vperm.xlu0 %925, %v285
  %v927 = vpop.permute.xlu0 %926
  %929 = vset.pattern.permute.xlu0 3
  %930 = vperm.xlu0 %929, %v290
  %v931 = vpop.permute.xlu0 %930
  %v933 = vlaneseq
  %v934 = vshrl.u32 %v933, 7
  %v935 = vsub.s32 3, %v934
  %v936 = vrot.slane %v361, %v935
  %v937 = vadd.f32 %v903, %v936
  %v938 = vadd.f32 %v907, %v936
  %v939 = vadd.f32 %v911, %v936
  %v940 = vadd.f32 %v915, %v936
  %v941 = vadd.f32 %v919, %v936
  %v942 = vadd.f32 %v923, %v936
  %v943 = vadd.f32 %v927, %v936
  %v944 = vadd.f32 %v931, %v936
  %vm945 = vcmp.gt.f32.partialorder %v937, 0.0
  %vm946 = vcmp.gt.f32.partialorder %v938, 0.0
  %vm947 = vcmp.gt.f32.partialorder %v939, 0.0
  %vm948 = vcmp.gt.f32.partialorder %v940, 0.0
  %vm949 = vcmp.gt.f32.partialorder %v941, 0.0
  %vm950 = vcmp.gt.f32.partialorder %v942, 0.0
  %vm951 = vcmp.gt.f32.partialorder %v943, 0.0
  %vm952 = vcmp.gt.f32.partialorder %v944, 0.0
  %v953 = vmul.f32 %v937, 0.2
  %v954 = vmul.f32 %v938, 0.2
  %v955 = vmul.f32 %v939, 0.2
  %v956 = vmul.f32 %v940, 0.2
  %v957 = vmul.f32 %v941, 0.2
  %v958 = vmul.f32 %v942, 0.2
  %v959 = vmul.f32 %v943, 0.2
  %v960 = vmul.f32 %v944, 0.2
  %v961 = vsel %vm945, %v937, %v953
  %v962 = vsel %vm946, %v938, %v954
  %v963 = vsel %vm947, %v939, %v955
  %v964 = vsel %vm948, %v940, %v956
  %v965 = vsel %vm949, %v941, %v957
  %v966 = vsel %vm950, %v942, %v958
  %v967 = vsel %vm951, %v943, %v959
  %v968 = vsel %vm952, %v944, %v960
  %v969 = vadd.f32 %v961, %v46
  %v970 = vadd.f32 %v962, %v47
  %v971 = vadd.f32 %v963, %v48
  %v972 = vadd.f32 %v964, %v49
  %v973 = vadd.f32 %v965, %v50
  %v974 = vadd.f32 %v966, %v51
  %v975 = vadd.f32 %v967, %v52
  %v976 = vadd.f32 %v968, %v53
  %v977 = vsel %vm448, %v969, -inf
  %978 = vmax.xlane.f32.xlu0 %v977
  %v979 = vpop.xlane.xlu0 %978
  %v980 = vsel %vm448, %v970, -inf
  %981 = vmax.xlane.f32.xlu0 %v980
  %v982 = vpop.xlane.xlu0 %981
  %v983 = vsel %vm448, %v971, -inf
  %984 = vmax.xlane.f32.xlu0 %v983
  %v985 = vpop.xlane.xlu0 %984
  %v986 = vsel %vm448, %v972, -inf
  %987 = vmax.xlane.f32.xlu0 %v986
  %v988 = vpop.xlane.xlu0 %987
  %v989 = vsel %vm448, %v973, -inf
  %990 = vmax.xlane.f32.xlu0 %v989
  %v991 = vpop.xlane.xlu0 %990
  %v992 = vsel %vm448, %v974, -inf
  %993 = vmax.xlane.f32.xlu0 %v992
  %v994 = vpop.xlane.xlu0 %993
  %v995 = vsel %vm448, %v975, -inf
  %996 = vmax.xlane.f32.xlu0 %v995
  %v997 = vpop.xlane.xlu0 %996
  %v998 = vsel %vm448, %v976, -inf
  %999 = vmax.xlane.f32.xlu0 %v998
  %v1000 = vpop.xlane.xlu0 %999
  %v1001 = vsub.f32 %v969, %v979
  %v1002 = vsub.f32 %v970, %v982
  %v1003 = vsub.f32 %v971, %v985
  %v1004 = vsub.f32 %v972, %v988
  %v1005 = vsub.f32 %v973, %v991
  %v1006 = vsub.f32 %v974, %v994
  %v1007 = vsub.f32 %v975, %v997
  %v1008 = vsub.f32 %v976, %v1000
  %v1009 = vmul.f32 %v1001, 1.442695
  %v1010 = vpow.pop %v1009
  %v1011 = vmul.f32 %v1002, 1.442695
  %v1012 = vpow.pop %v1011
  %v1013 = vmul.f32 %v1003, 1.442695
  %v1014 = vpow.pop %v1013
  %v1015 = vmul.f32 %v1004, 1.442695
  %v1016 = vpow.pop %v1015
  %v1017 = vmul.f32 %v1005, 1.442695
  %v1018 = vpow.pop %v1017
  %v1019 = vmul.f32 %v1006, 1.442695
  %v1020 = vpow.pop %v1019
  %v1021 = vmul.f32 %v1007, 1.442695
  %v1022 = vpow.pop %v1021
  %v1023 = vmul.f32 %v1008, 1.442695
  %v1024 = vpow.pop %v1023
  %v1025 = vsel %vm448, %v1010, 0.0
  %1026 = vadd.xlane.f32.xlu0 %v1025
  %v1027 = vpop.xlane.xlu0 %1026
  %v1028 = vsel %vm448, %v1012, 0.0
  %1029 = vadd.xlane.f32.xlu0 %v1028
  %v1030 = vpop.xlane.xlu0 %1029
  %v1031 = vsel %vm448, %v1014, 0.0
  %1032 = vadd.xlane.f32.xlu0 %v1031
  %v1033 = vpop.xlane.xlu0 %1032
  %v1034 = vsel %vm448, %v1016, 0.0
  %1035 = vadd.xlane.f32.xlu0 %v1034
  %v1036 = vpop.xlane.xlu0 %1035
  %v1037 = vsel %vm448, %v1018, 0.0
  %1038 = vadd.xlane.f32.xlu0 %v1037
  %v1039 = vpop.xlane.xlu0 %1038
  %v1040 = vsel %vm448, %v1020, 0.0
  %1041 = vadd.xlane.f32.xlu0 %v1040
  %v1042 = vpop.xlane.xlu0 %1041
  %v1043 = vsel %vm448, %v1022, 0.0
  %1044 = vadd.xlane.f32.xlu0 %v1043
  %v1045 = vpop.xlane.xlu0 %1044
  %v1046 = vsel %vm448, %v1024, 0.0
  %1047 = vadd.xlane.f32.xlu0 %v1046
  %v1048 = vpop.xlane.xlu0 %1047
  %v1049 = vrcp.pop %v1027
  %v1050 = vrcp.pop %v1030
  %v1051 = vrcp.pop %v1033
  %v1052 = vrcp.pop %v1036
  %v1053 = vrcp.pop %v1039
  %v1054 = vrcp.pop %v1042
  %v1055 = vrcp.pop %v1045
  %v1056 = vrcp.pop %v1048
  %v1057 = vmul.f32 %v1010, %v1049
  %v1058 = vmul.f32 %v1012, %v1050
  %v1059 = vmul.f32 %v1014, %v1051
  %v1060 = vmul.f32 %v1016, %v1052
  %v1061 = vmul.f32 %v1018, %v1053
  %v1062 = vmul.f32 %v1020, %v1054
  %v1063 = vmul.f32 %v1022, %v1055
  %v1064 = vmul.f32 %v1024, %v1056
  %v1065 = vlaneseq
  %v1066 = vshrl.u32 %v1065, 7
  %v1067 = vsub.s32 3, %v1066
  %v1068 = vrot.slane %v54, %v1067
  %v1069 = vmul.f32 %v149, %v1068
  %v1070 = vmul.f32 %v154, %v1068
  %v1071 = vmul.f32 %v159, %v1068
  %v1072 = vmul.f32 %v164, %v1068
  %v1073 = vmul.f32 %v169, %v1068
  %v1074 = vmul.f32 %v174, %v1068
  %v1075 = vmul.f32 %v179, %v1068
  %v1076 = vmul.f32 %v184, %v1068
  %1085 = vrot.lane.b32.xlu0 %v705, 64
  %v1086 = vpop.permute.xlu0 %1085
  %1087 = vrot.lane.b32.xlu0 %v706, 64
  %v1088 = vpop.permute.xlu0 %1087
  %1089 = vrot.lane.b32.xlu0 %v707, 64
  %v1090 = vpop.permute.xlu0 %1089
  %1091 = vrot.lane.b32.xlu0 %v708, 64
  %v1092 = vpop.permute.xlu0 %1091
  %1093 = vrot.lane.b32.xlu0 %v709, 64
  %v1094 = vpop.permute.xlu0 %1093
  %1095 = vrot.lane.b32.xlu0 %v710, 64
  %v1096 = vpop.permute.xlu0 %1095
  %1097 = vrot.lane.b32.xlu0 %v711, 64
  %v1098 = vpop.permute.xlu0 %1097
  %1099 = vrot.lane.b32.xlu0 %v712, 64
  %v1100 = vpop.permute.xlu0 %1099
  %1117 = vrot.lane.b32.xlu0 %v1057, 64
  %v1118 = vpop.permute.xlu0 %1117
  %1119 = vrot.lane.b32.xlu0 %v1058, 64
  %v1120 = vpop.permute.xlu0 %1119
  %1121 = vrot.lane.b32.xlu0 %v1059, 64
  %v1122 = vpop.permute.xlu0 %1121
  %1123 = vrot.lane.b32.xlu0 %v1060, 64
  %v1124 = vpop.permute.xlu0 %1123
  %1125 = vrot.lane.b32.xlu0 %v1061, 64
  %v1126 = vpop.permute.xlu0 %1125
  %1127 = vrot.lane.b32.xlu0 %v1062, 64
  %v1128 = vpop.permute.xlu0 %1127
  %1129 = vrot.lane.b32.xlu0 %v1063, 64
  %v1130 = vpop.permute.xlu0 %1129
  %1131 = vrot.lane.b32.xlu0 %v1064, 64
  %v1132 = vpop.permute.xlu0 %1131
  %v1141 = vsel %vm448, %v529, %v1086
  %v1142 = vsel %vm448, %v530, %v1088
  %v1143 = vsel %vm448, %v531, %v1090
  %v1144 = vsel %vm448, %v532, %v1092
  %v1145 = vsel %vm448, %v533, %v1094
  %v1146 = vsel %vm448, %v534, %v1096
  %v1147 = vsel %vm448, %v535, %v1098
  %v1148 = vsel %vm448, %v536, %v1100
  %v1149 = vsel %vm448, %v881, %v1118
  %v1150 = vsel %vm448, %v882, %v1120
  %v1151 = vsel %vm448, %v883, %v1122
  %v1152 = vsel %vm448, %v884, %v1124
  %v1153 = vsel %vm448, %v885, %v1126
  %v1154 = vsel %vm448, %v886, %v1128
  %v1155 = vsel %vm448, %v887, %v1130
  %v1156 = vsel %vm448, %v888, %v1132
  %v1157 = vld [vmem:[%s5] sm:$0x1]
  %v1159 = vlaneseq
  %v1160 = vshrl.u32 %v1159, 7
  %v1161 = vsub.s32 0, %v1160
  %v1162 = vrot.slane %v1157, %v1161
  %1164 = vmatprep.subr.mxu0 0.0
  %1165 = vmatpush1.msra.mxu0 %v541
  %1166 = vmatprep.subr.mxu0 0.0
  %1167 = vmatpush1.msra.mxu0 %v542
  %1168 = vmatprep.subr.mxu0 0.0
  %1169 = vmatpush1.msra.mxu0 %v543
  %1170 = vmatprep.subr.mxu0 0.0
  %1171 = vmatpush1.msra.mxu0 %v544
  %1172 = vmatprep.subr.mxu0 0.0
  %1173 = vmatpush1.msra.mxu0 %v545
  %1174 = vmatprep.subr.mxu0 0.0
  %1175 = vmatpush1.msra.mxu0 %v546
  %1176 = vmatprep.subr.mxu0 0.0
  %1177 = vmatpush1.msra.mxu0 %v547
  %1178 = vmatprep.subr.mxu0 0.0
  %1179 = vmatpush1.msra.mxu0 %v548
  %1180 = vmatprep.subr.mxu0 0.0
  %1181 = vmatpush1.msra.mxu0 %v717
  %1182 = vmatprep.subr.mxu0 0.0
  %1183 = vmatpush1.msra.mxu0 %v718
  %1184 = vmatprep.subr.mxu0 0.0
  %1185 = vmatpush1.msra.mxu0 %v719
  %1186 = vmatprep.subr.mxu0 0.0
  %1187 = vmatpush1.msra.mxu0 %v720
  %1188 = vmatprep.subr.mxu0 0.0
  %1189 = vmatpush1.msra.mxu0 %v721
  %1190 = vmatprep.subr.mxu0 0.0
  %1191 = vmatpush1.msra.mxu0 %v722
  %1192 = vmatprep.subr.mxu0 0.0
  %1193 = vmatpush1.msra.mxu0 %v723
  %1194 = vmatprep.subr.mxu0 0.0
  %1195 = vmatpush1.msra.mxu0 %v724
  %1196 = vmatprep.subr.mxu0 0.0
  %1197 = vmatpush1.msra.mxu0 %v893
  %1198 = vmatprep.subr.mxu0 0.0
  %1199 = vmatpush1.msra.mxu0 %v894
  %1200 = vmatprep.subr.mxu0 0.0
  %1201 = vmatpush1.msra.mxu0 %v895
  %1202 = vmatprep.subr.mxu0 0.0
  %1203 = vmatpush1.msra.mxu0 %v896
  %1204 = vmatprep.subr.mxu0 0.0
  %1205 = vmatpush1.msra.mxu0 %v897
  %1206 = vmatprep.subr.mxu0 0.0
  %1207 = vmatpush1.msra.mxu0 %v898
  %1208 = vmatprep.subr.mxu0 0.0
  %1209 = vmatpush1.msra.mxu0 %v899
  %1210 = vmatprep.subr.mxu0 0.0
  %1211 = vmatpush1.msra.mxu0 %v900
  %1212 = vmatprep.subr.mxu0 0.0
  %1213 = vmatpush1.msra.mxu0 %v1069
  %1214 = vmatprep.subr.mxu0 0.0
  %1215 = vmatpush1.msra.mxu0 %v1070
  %1216 = vmatprep.subr.mxu0 0.0
  %1217 = vmatpush1.msra.mxu0 %v1071
  %1218 = vmatprep.subr.mxu0 0.0
  %1219 = vmatpush1.msra.mxu0 %v1072
  %1220 = vmatprep.subr.mxu0 0.0
  %1221 = vmatpush1.msra.mxu0 %v1073
  %1222 = vmatprep.subr.mxu0 0.0
  %1223 = vmatpush1.msra.mxu0 %v1074
  %1224 = vmatprep.subr.mxu0 0.0
  %1225 = vmatpush1.msra.mxu0 %v1075
  %1226 = vmatprep.subr.mxu0 0.0
  %1227 = vmatpush1.msra.mxu0 %v1076
  %1228 = vmatprep.mubr.f32.mxu0 %v1149
  %1229 = vmatmul.mubr.f32.gmra.mrb[0].mxu0 %v1141
  %v1230 = vpop.f32.mrb[0].mxu0
  %v1231 = vadd.f32 %v1162, %v1230
  %v1232 = vpop.f32.mrb[0].mxu0
  %1233 = vmatprep.mubr.f32.mxu0 %v1150
  %1234 = vmatmul.mubr.f32.gmra.mrb[0].mxu0 %v1142
  %v1235 = vpop.f32.mrb[0].mxu0
  %v1236 = vadd.f32 %v1162, %v1235
  %v1237 = vpop.f32.mrb[0].mxu0
  %1238 = vmatprep.mubr.f32.mxu0 %v1151
  %1239 = vmatmul.mubr.f32.gmra.mrb[0].mxu0 %v1143
  %v1240 = vpop.f32.mrb[0].mxu0
  %v1241 = vadd.f32 %v1162, %v1240
  %v1242 = vpop.f32.mrb[0].mxu0
  %1243 = vmatprep.mubr.f32.mxu0 %v1152
  %1244 = vmatmul.mubr.f32.gmra.mrb[0].mxu0 %v1144
  %v1245 = vpop.f32.mrb[0].mxu0
  %v1246 = vadd.f32 %v1162, %v1245
  %v1247 = vpop.f32.mrb[0].mxu0
  %1248 = vmatprep.mubr.f32.mxu0 %v1153
  %1249 = vmatmul.mubr.f32.gmra.mrb[0].mxu0 %v1145
  %v1250 = vpop.f32.mrb[0].mxu0
  %v1251 = vadd.f32 %v1162, %v1250
  %v1252 = vpop.f32.mrb[0].mxu0
  %1253 = vmatprep.mubr.f32.mxu0 %v1154
  %1254 = vmatmul.mubr.f32.gmra.mrb[0].mxu0 %v1146
  %v1255 = vpop.f32.mrb[0].mxu0
  %v1256 = vadd.f32 %v1162, %v1255
  %v1257 = vpop.f32.mrb[0].mxu0
  %1258 = vmatprep.mubr.f32.mxu0 %v1155
  %1259 = vmatmul.mubr.f32.gmra.mrb[0].mxu0 %v1147
  %v1260 = vpop.f32.mrb[0].mxu0
  %v1261 = vadd.f32 %v1162, %v1260
  %v1262 = vpop.f32.mrb[0].mxu0
  %1263 = vmatprep.mubr.f32.mxu0 %v1156
  %1264 = vmatmul.mubr.f32.gmra.mrb[0].mxu0 %v1148
  %v1265 = vpop.f32.mrb[0].mxu0
  %v1266 = vadd.f32 %v1162, %v1265
  %v1267 = vpop.f32.mrb[0].mxu0
  %1268 = vdwg.mxu0
  %v1269 = vld [vmem:[%s7] sm:$0xff]
  %v1270 = vld [vmem:[%s7 + $0x8] sm:$0xff]
  %v1271 = vld [vmem:[%s7 + $0x10] sm:$0xff]
  %v1272 = vld [vmem:[%s7 + $0x18] sm:$0xff]
  %v1273 = vld [vmem:[%s7 + $0x20] sm:$0xff]
  %v1274 = vld [vmem:[%s7 + $0x28] sm:$0xff]
  %v1275 = vld [vmem:[%s7 + $0x30] sm:$0xff]
  %v1276 = vld [vmem:[%s7 + $0x38] sm:$0xff]
  %v1277 = vld [vmem:[%s7 + $0x40] sm:$0xff]
  %v1278 = vld [vmem:[%s7 + $0x48] sm:$0xff]
  %v1279 = vld [vmem:[%s7 + $0x50] sm:$0xff]
  %v1280 = vld [vmem:[%s7 + $0x58] sm:$0xff]
  %v1281 = vld [vmem:[%s7 + $0x60] sm:$0xff]
  %v1282 = vld [vmem:[%s7 + $0x68] sm:$0xff]
  %v1283 = vld [vmem:[%s7 + $0x70] sm:$0xff]
  %v1284 = vld [vmem:[%s7 + $0x78] sm:$0xff]
  %1285 = vmatprep.subr.mxu0 0.0
  %1286 = vmatpush1.msra.mxu0 %v1269
  %1287 = vmatprep.subr.mxu0 0.0
  %1288 = vmatpush1.msra.mxu0 %v1270
  %1289 = vmatprep.subr.mxu0 0.0
  %1290 = vmatpush1.msra.mxu0 %v1271
  %1291 = vmatprep.subr.mxu0 0.0
  %1292 = vmatpush1.msra.mxu0 %v1272
  %1293 = vmatprep.subr.mxu0 0.0
  %1294 = vmatpush1.msra.mxu0 %v1273
  %1295 = vmatprep.subr.mxu0 0.0
  %1296 = vmatpush1.msra.mxu0 %v1274
  %1297 = vmatprep.subr.mxu0 0.0
  %1298 = vmatpush1.msra.mxu0 %v1275
  %1299 = vmatprep.subr.mxu0 0.0
  %1300 = vmatpush1.msra.mxu0 %v1276
  %1301 = vmatprep.subr.mxu0 0.0
  %1302 = vmatpush1.msra.mxu0 %v1277
  %1303 = vmatprep.subr.mxu0 0.0
  %1304 = vmatpush1.msra.mxu0 %v1278
  %1305 = vmatprep.subr.mxu0 0.0
  %1306 = vmatpush1.msra.mxu0 %v1279
  %1307 = vmatprep.subr.mxu0 0.0
  %1308 = vmatpush1.msra.mxu0 %v1280
  %1309 = vmatprep.subr.mxu0 0.0
  %1310 = vmatpush1.msra.mxu0 %v1281
  %1311 = vmatprep.subr.mxu0 0.0
  %1312 = vmatpush1.msra.mxu0 %v1282
  %1313 = vmatprep.subr.mxu0 0.0
  %1314 = vmatpush1.msra.mxu0 %v1283
  %1315 = vmatprep.subr.mxu0 0.0
  %1316 = vmatpush1.msra.mxu0 %v1284
  %1317 = vmatprep.subr.mxu0 0.0
  %1318 = vmatpush1.msra.mxu0 0.0
  %1319 = vmatprep.subr.mxu0 0.0
  %1320 = vmatpush1.msra.mxu0 0.0
  %1321 = vmatprep.subr.mxu0 0.0
  %1322 = vmatpush1.msra.mxu0 0.0
  %1323 = vmatprep.subr.mxu0 0.0
  %1324 = vmatpush1.msra.mxu0 0.0
  %1325 = vmatprep.subr.mxu0 0.0
  %1326 = vmatpush1.msra.mxu0 0.0
  %1327 = vmatprep.subr.mxu0 0.0
  %1328 = vmatpush1.msra.mxu0 0.0
  %1329 = vmatprep.subr.mxu0 0.0
  %1330 = vmatpush1.msra.mxu0 0.0
  %1331 = vmatprep.subr.mxu0 0.0
  %1332 = vmatpush1.msra.mxu0 0.0
  %1333 = vmatprep.subr.mxu0 0.0
  %1334 = vmatpush1.msra.mxu0 0.0
  %1335 = vmatprep.subr.mxu0 0.0
  %1336 = vmatpush1.msra.mxu0 0.0
  %1337 = vmatprep.subr.mxu0 0.0
  %1338 = vmatpush1.msra.mxu0 0.0
  %1339 = vmatprep.subr.mxu0 0.0
  %1340 = vmatpush1.msra.mxu0 0.0
  %1341 = vmatprep.subr.mxu0 0.0
  %1342 = vmatpush1.msra.mxu0 0.0
  %1343 = vmatprep.subr.mxu0 0.0
  %1344 = vmatpush1.msra.mxu0 0.0
  %1345 = vmatprep.subr.mxu0 0.0
  %1346 = vmatpush1.msra.mxu0 0.0
  %1347 = vmatprep.subr.mxu0 0.0
  %1348 = vmatpush1.msra.mxu0 0.0
  %1349 = vmatprep.mubr.f32.mxu0 0.0
  %1350 = vmatmul.mubr.f32.gmra.mrb[0].mxu0 %v1231
  %v1351 = vpop.f32.mrb[0].mxu0
  %v1352 = vadd.f32 0.0, %v1351
  %v1353 = vpop.f32.mrb[0].mxu0
  %1354 = vmatprep.mubr.f32.mxu0 0.0
  %1355 = vmatmul.mubr.f32.gmra.mrb[0].mxu0 %v1236
  %v1356 = vpop.f32.mrb[0].mxu0
  %v1357 = vadd.f32 0.0, %v1356
  %v1358 = vpop.f32.mrb[0].mxu0
  %1359 = vmatprep.mubr.f32.mxu0 0.0
  %1360 = vmatmul.mubr.f32.gmra.mrb[0].mxu0 %v1241
  %v1361 = vpop.f32.mrb[0].mxu0
  %v1362 = vadd.f32 0.0, %v1361
  %v1363 = vpop.f32.mrb[0].mxu0
  %1364 = vmatprep.mubr.f32.mxu0 0.0
  %1365 = vmatmul.mubr.f32.gmra.mrb[0].mxu0 %v1246
  %v1366 = vpop.f32.mrb[0].mxu0
  %v1367 = vadd.f32 0.0, %v1366
  %v1368 = vpop.f32.mrb[0].mxu0
  %1369 = vmatprep.mubr.f32.mxu0 0.0
  %1370 = vmatmul.mubr.f32.gmra.mrb[0].mxu0 %v1251
  %v1371 = vpop.f32.mrb[0].mxu0
  %v1372 = vadd.f32 0.0, %v1371
  %v1373 = vpop.f32.mrb[0].mxu0
  %1374 = vmatprep.mubr.f32.mxu0 0.0
  %1375 = vmatmul.mubr.f32.gmra.mrb[0].mxu0 %v1256
  %v1376 = vpop.f32.mrb[0].mxu0
  %v1377 = vadd.f32 0.0, %v1376
  %v1378 = vpop.f32.mrb[0].mxu0
  %1379 = vmatprep.mubr.f32.mxu0 0.0
  %1380 = vmatmul.mubr.f32.gmra.mrb[0].mxu0 %v1261
  %v1381 = vpop.f32.mrb[0].mxu0
  %v1382 = vadd.f32 0.0, %v1381
  %v1383 = vpop.f32.mrb[0].mxu0
  %1384 = vmatprep.mubr.f32.mxu0 0.0
  %1385 = vmatmul.mubr.f32.gmra.mrb[0].mxu0 %v1266
  %v1386 = vpop.f32.mrb[0].mxu0
  %v1387 = vadd.f32 0.0, %v1386
  %v1388 = vpop.f32.mrb[0].mxu0
  %1389 = vdwg.mxu0
  %v1390 = vld [vmem:[%s9] sm:$0x1]
  %v1392 = vlaneseq
  %v1393 = vshrl.u32 %v1392, 7
  %v1394 = vsub.s32 0, %v1393
  %v1395 = vrot.slane %v1390, %v1394
  %v1397 = vmul.f32 %v1352, %v1395
  %v1398 = vmul.f32 %v1357, %v1395
  %v1399 = vmul.f32 %v1362, %v1395
  %v1400 = vmul.f32 %v1367, %v1395
  %v1401 = vmul.f32 %v1372, %v1395
  %v1402 = vmul.f32 %v1377, %v1395
  %v1403 = vmul.f32 %v1382, %v1395
  %v1404 = vmul.f32 %v1387, %v1395
  %1405 = vadd.xlane.f32.xlu0 %v1397
  %v1406 = vpop.xlane.xlu0 %1405
  %1407 = vadd.xlane.f32.xlu0 %v1398
  %v1408 = vpop.xlane.xlu0 %1407
  %1409 = vadd.xlane.f32.xlu0 %v1399
  %v1410 = vpop.xlane.xlu0 %1409
  %1411 = vadd.xlane.f32.xlu0 %v1400
  %v1412 = vpop.xlane.xlu0 %1411
  %1413 = vadd.xlane.f32.xlu0 %v1401
  %v1414 = vpop.xlane.xlu0 %1413
  %1415 = vadd.xlane.f32.xlu0 %v1402
  %v1416 = vpop.xlane.xlu0 %1415
  %1417 = vadd.xlane.f32.xlu0 %v1403
  %v1418 = vpop.xlane.xlu0 %1417
  %1419 = vadd.xlane.f32.xlu0 %v1404
  %v1420 = vpop.xlane.xlu0 %1419
  %v1421 = vld [vmem:[%s8] sm:$0x1]
  %1422 = vmatprep.subr.mxu0 0.0
  %1423 = vmatpush1.xpose.msra.mxu0 %v1352
  %1424 = vmatprep.subr.mxu0 0.0
  %1425 = vmatpush1.xpose.msra.mxu0 %v1357
  %1426 = vmatprep.subr.mxu0 0.0
  %1427 = vmatpush1.xpose.msra.mxu0 %v1362
  %1428 = vmatprep.subr.mxu0 0.0
  %1429 = vmatpush1.xpose.msra.mxu0 %v1367
  %1430 = vmatprep.subr.mxu0 0.0
  %1431 = vmatpush1.xpose.msra.mxu0 %v1372
  %1432 = vmatprep.subr.mxu0 0.0
  %1433 = vmatpush1.xpose.msra.mxu0 %v1377
  %1434 = vmatprep.subr.mxu0 0.0
  %1435 = vmatpush1.xpose.msra.mxu0 %v1382
  %1436 = vmatprep.subr.mxu0 0.0
  %1437 = vmatpush1.xpose.msra.mxu0 %v1387
  %1438 = vmatprep.subr.mxu0 0.0
  %1439 = vmatpush1.xpose.msra.mxu0 0.0
  %1440 = vmatprep.subr.mxu0 0.0
  %1441 = vmatpush1.xpose.msra.mxu0 0.0
  %1442 = vmatprep.subr.mxu0 0.0
  %1443 = vmatpush1.xpose.msra.mxu0 0.0
  %1444 = vmatprep.subr.mxu0 0.0
  %1445 = vmatpush1.xpose.msra.mxu0 0.0
  %1446 = vmatprep.subr.mxu0 0.0
  %1447 = vmatpush1.xpose.msra.mxu0 0.0
  %1448 = vmatprep.subr.mxu0 0.0
  %1449 = vmatpush1.xpose.msra.mxu0 0.0
  %1450 = vmatprep.subr.mxu0 0.0
  %1451 = vmatpush1.xpose.msra.mxu0 0.0
  %1452 = vmatprep.subr.mxu0 0.0
  %1453 = vmatpush1.xpose.msra.mxu0 0.0
  %1454 = vmatprep.subr.mxu0 0.0
  %1455 = vmatpush1.xpose.msra.mxu0 0.0
  %1456 = vmatprep.subr.mxu0 0.0
  %1457 = vmatpush1.xpose.msra.mxu0 0.0
  %1458 = vmatprep.subr.mxu0 0.0
  %1459 = vmatpush1.xpose.msra.mxu0 0.0
  %1460 = vmatprep.subr.mxu0 0.0
  %1461 = vmatpush1.xpose.msra.mxu0 0.0
  %1462 = vmatprep.subr.mxu0 0.0
  %1463 = vmatpush1.xpose.msra.mxu0 0.0
  %1464 = vmatprep.subr.mxu0 0.0
  %1465 = vmatpush1.xpose.msra.mxu0 0.0
  %1466 = vmatprep.subr.mxu0 0.0
  %1467 = vmatpush1.xpose.msra.mxu0 0.0
  %1468 = vmatprep.subr.mxu0 0.0
  %1469 = vmatpush1.xpose.msra.mxu0 0.0
  %1470 = vmatprep.subr.mxu0 0.0
  %1471 = vmatpush1.xpose.msra.mxu0 0.0
  %1472 = vmatprep.subr.mxu0 0.0
  %1473 = vmatpush1.xpose.msra.mxu0 0.0
  %1474 = vmatprep.subr.mxu0 0.0
  %1475 = vmatpush1.xpose.msra.mxu0 0.0
  %1476 = vmatprep.subr.mxu0 0.0
  %1477 = vmatpush1.xpose.msra.mxu0 0.0
  %1478 = vmatprep.subr.mxu0 0.0
  %1479 = vmatpush1.xpose.msra.mxu0 0.0
  %1480 = vmatprep.subr.mxu0 0.0
  %1481 = vmatpush1.xpose.msra.mxu0 0.0
  %1482 = vmatprep.subr.mxu0 0.0
  %1483 = vmatpush1.xpose.msra.mxu0 0.0
  %1484 = vmatprep.subr.mxu0 0.0
  %1485 = vmatpush1.xpose.msra.mxu0 0.0
  %1486 = vmatprep.mubr.f32.mxu0 0.0
  %1487 = vmatmul.mubr.f32.gmra.mrb[0].mxu0 %v1421
  %v1488 = vpop.f32.mrb[0].mxu0
  %v1489 = vadd.f32 0.0, %v1488
  %v1490 = vpop.f32.mrb[0].mxu0
  %1491 = vdwg.mxu0
  %v1492 = vlaneseq
  %v1493 = vshrl.u32 %v1492, 7
  %v1494 = vsub.s32 0, %v1493
  %v1495 = vrot.slane %v1489, %v1494
  %v1496 = vadd.f32 %v1406, %v1495
  %v1497 = vadd.f32 %v1408, %v1495
  %v1498 = vadd.f32 %v1410, %v1495
  %v1499 = vadd.f32 %v1412, %v1495
  %v1500 = vadd.f32 %v1414, %v1495
  %v1501 = vadd.f32 %v1416, %v1495
  %v1502 = vadd.f32 %v1418, %v1495
  %v1503 = vadd.f32 %v1420, %v1495
  %vm1504 = vcmp.gt.f32.partialorder %v1496, 0.0
  %vm1505 = vcmp.gt.f32.partialorder %v1497, 0.0
  %vm1506 = vcmp.gt.f32.partialorder %v1498, 0.0
  %vm1507 = vcmp.gt.f32.partialorder %v1499, 0.0
  %vm1508 = vcmp.gt.f32.partialorder %v1500, 0.0
  %vm1509 = vcmp.gt.f32.partialorder %v1501, 0.0
  %vm1510 = vcmp.gt.f32.partialorder %v1502, 0.0
  %vm1511 = vcmp.gt.f32.partialorder %v1503, 0.0
  %v1512 = vmul.f32 %v1496, 0.2
  %v1513 = vmul.f32 %v1497, 0.2
  %v1514 = vmul.f32 %v1498, 0.2
  %v1515 = vmul.f32 %v1499, 0.2
  %v1516 = vmul.f32 %v1500, 0.2
  %v1517 = vmul.f32 %v1501, 0.2
  %v1518 = vmul.f32 %v1502, 0.2
  %v1519 = vmul.f32 %v1503, 0.2
  %v1520 = vsel %vm1504, %v1496, %v1512
  %v1521 = vsel %vm1505, %v1497, %v1513
  %v1522 = vsel %vm1506, %v1498, %v1514
  %v1523 = vsel %vm1507, %v1499, %v1515
  %v1524 = vsel %vm1508, %v1500, %v1516
  %v1525 = vsel %vm1509, %v1501, %v1517
  %v1526 = vsel %vm1510, %v1502, %v1518
  %v1527 = vsel %vm1511, %v1503, %v1519
  %v1528 = vadd.f32 %v1520, %v46
  %v1529 = vadd.f32 %v1521, %v47
  %v1530 = vadd.f32 %v1522, %v48
  %v1531 = vadd.f32 %v1523, %v49
  %v1532 = vadd.f32 %v1524, %v50
  %v1533 = vadd.f32 %v1525, %v51
  %v1534 = vadd.f32 %v1526, %v52
  %v1535 = vadd.f32 %v1527, %v53
  %v1536 = vsel %vm448, %v1528, -inf
  %1537 = vmax.xlane.f32.xlu0 %v1536
  %v1538 = vpop.xlane.xlu0 %1537
  %v1539 = vsel %vm448, %v1529, -inf
  %1540 = vmax.xlane.f32.xlu0 %v1539
  %v1541 = vpop.xlane.xlu0 %1540
  %v1542 = vsel %vm448, %v1530, -inf
  %1543 = vmax.xlane.f32.xlu0 %v1542
  %v1544 = vpop.xlane.xlu0 %1543
  %v1545 = vsel %vm448, %v1531, -inf
  %1546 = vmax.xlane.f32.xlu0 %v1545
  %v1547 = vpop.xlane.xlu0 %1546
  %v1548 = vsel %vm448, %v1532, -inf
  %1549 = vmax.xlane.f32.xlu0 %v1548
  %v1550 = vpop.xlane.xlu0 %1549
  %v1551 = vsel %vm448, %v1533, -inf
  %1552 = vmax.xlane.f32.xlu0 %v1551
  %v1553 = vpop.xlane.xlu0 %1552
  %v1554 = vsel %vm448, %v1534, -inf
  %1555 = vmax.xlane.f32.xlu0 %v1554
  %v1556 = vpop.xlane.xlu0 %1555
  %v1557 = vsel %vm448, %v1535, -inf
  %1558 = vmax.xlane.f32.xlu0 %v1557
  %v1559 = vpop.xlane.xlu0 %1558
  %v1560 = vsub.f32 %v1528, %v1538
  %v1561 = vsub.f32 %v1529, %v1541
  %v1562 = vsub.f32 %v1530, %v1544
  %v1563 = vsub.f32 %v1531, %v1547
  %v1564 = vsub.f32 %v1532, %v1550
  %v1565 = vsub.f32 %v1533, %v1553
  %v1566 = vsub.f32 %v1534, %v1556
  %v1567 = vsub.f32 %v1535, %v1559
  %v1568 = vmul.f32 %v1560, 1.442695
  %v1569 = vpow.pop %v1568
  %v1570 = vmul.f32 %v1561, 1.442695
  %v1571 = vpow.pop %v1570
  %v1572 = vmul.f32 %v1562, 1.442695
  %v1573 = vpow.pop %v1572
  %v1574 = vmul.f32 %v1563, 1.442695
  %v1575 = vpow.pop %v1574
  %v1576 = vmul.f32 %v1564, 1.442695
  %v1577 = vpow.pop %v1576
  %v1578 = vmul.f32 %v1565, 1.442695
  %v1579 = vpow.pop %v1578
  %v1580 = vmul.f32 %v1566, 1.442695
  %v1581 = vpow.pop %v1580
  %v1582 = vmul.f32 %v1567, 1.442695
  %v1583 = vpow.pop %v1582
  %v1584 = vsel %vm448, %v1569, 0.0
  %1585 = vadd.xlane.f32.xlu0 %v1584
  %v1586 = vpop.xlane.xlu0 %1585
  %v1587 = vsel %vm448, %v1571, 0.0
  %1588 = vadd.xlane.f32.xlu0 %v1587
  %v1589 = vpop.xlane.xlu0 %1588
  %v1590 = vsel %vm448, %v1573, 0.0
  %1591 = vadd.xlane.f32.xlu0 %v1590
  %v1592 = vpop.xlane.xlu0 %1591
  %v1593 = vsel %vm448, %v1575, 0.0
  %1594 = vadd.xlane.f32.xlu0 %v1593
  %v1595 = vpop.xlane.xlu0 %1594
  %v1596 = vsel %vm448, %v1577, 0.0
  %1597 = vadd.xlane.f32.xlu0 %v1596
  %v1598 = vpop.xlane.xlu0 %1597
  %v1599 = vsel %vm448, %v1579, 0.0
  %1600 = vadd.xlane.f32.xlu0 %v1599
  %v1601 = vpop.xlane.xlu0 %1600
  %v1602 = vsel %vm448, %v1581, 0.0
  %1603 = vadd.xlane.f32.xlu0 %v1602
  %v1604 = vpop.xlane.xlu0 %1603
  %v1605 = vsel %vm448, %v1583, 0.0
  %1606 = vadd.xlane.f32.xlu0 %v1605
  %v1607 = vpop.xlane.xlu0 %1606
  %v1608 = vrcp.pop %v1586
  %v1609 = vrcp.pop %v1589
  %v1610 = vrcp.pop %v1592
  %v1611 = vrcp.pop %v1595
  %v1612 = vrcp.pop %v1598
  %v1613 = vrcp.pop %v1601
  %v1614 = vrcp.pop %v1604
  %v1615 = vrcp.pop %v1607
  %v1616 = vmul.f32 %v1569, %v1608
  %v1617 = vmul.f32 %v1571, %v1609
  %v1618 = vmul.f32 %v1573, %v1610
  %v1619 = vmul.f32 %v1575, %v1611
  %v1620 = vmul.f32 %v1577, %v1612
  %v1621 = vmul.f32 %v1579, %v1613
  %v1622 = vmul.f32 %v1581, %v1614
  %v1623 = vmul.f32 %v1583, %v1615
  %v1624 = vld [vmem:[%s10] sm:$0x1]
  %v1626 = vlaneseq
  %v1627 = vshrl.u32 %v1626, 7
  %v1628 = vsub.s32 0, %v1627
  %v1629 = vrot.slane %v1624, %v1628
  %v1632 = vsel %vm448, %v1616, 0
  %v1635 = vsel %vm448, %v1617, 0
  %v1638 = vsel %vm448, %v1618, 0
  %v1641 = vsel %vm448, %v1619, 0
  %v1644 = vsel %vm448, %v1620, 0
  %v1647 = vsel %vm448, %v1621, 0
  %v1650 = vsel %vm448, %v1622, 0
  %v1653 = vsel %vm448, %v1623, 0
  %1655 = vmatprep.subr.mxu0 0.0
  %1656 = vmatpush1.msra.mxu0 %v1352
  %1657 = vmatprep.subr.mxu0 0.0
  %1658 = vmatpush1.msra.mxu0 %v1357
  %1659 = vmatprep.subr.mxu0 0.0
  %1660 = vmatpush1.msra.mxu0 %v1362
  %1661 = vmatprep.subr.mxu0 0.0
  %1662 = vmatpush1.msra.mxu0 %v1367
  %1663 = vmatprep.subr.mxu0 0.0
  %1664 = vmatpush1.msra.mxu0 %v1372
  %1665 = vmatprep.subr.mxu0 0.0
  %1666 = vmatpush1.msra.mxu0 %v1377
  %1667 = vmatprep.subr.mxu0 0.0
  %1668 = vmatpush1.msra.mxu0 %v1382
  %1669 = vmatprep.subr.mxu0 0.0
  %1670 = vmatpush1.msra.mxu0 %v1387
  %1671 = vmatprep.subr.mxu0 0.0
  %1672 = vmatpush1.msra.mxu0 0.0
  %1673 = vmatprep.subr.mxu0 0.0
  %1674 = vmatpush1.msra.mxu0 0.0
  %1675 = vmatprep.subr.mxu0 0.0
  %1676 = vmatpush1.msra.mxu0 0.0
  %1677 = vmatprep.subr.mxu0 0.0
  %1678 = vmatpush1.msra.mxu0 0.0
  %1679 = vmatprep.subr.mxu0 0.0
  %1680 = vmatpush1.msra.mxu0 0.0
  %1681 = vmatprep.subr.mxu0 0.0
  %1682 = vmatpush1.msra.mxu0 0.0
  %1683 = vmatprep.subr.mxu0 0.0
  %1684 = vmatpush1.msra.mxu0 0.0
  %1685 = vmatprep.subr.mxu0 0.0
  %1686 = vmatpush1.msra.mxu0 0.0
  %1687 = vmatprep.subr.mxu0 0.0
  %1688 = vmatpush1.msra.mxu0 0.0
  %1689 = vmatprep.subr.mxu0 0.0
  %1690 = vmatpush1.msra.mxu0 0.0
  %1691 = vmatprep.subr.mxu0 0.0
  %1692 = vmatpush1.msra.mxu0 0.0
  %1693 = vmatprep.subr.mxu0 0.0
  %1694 = vmatpush1.msra.mxu0 0.0
  %1695 = vmatprep.subr.mxu0 0.0
  %1696 = vmatpush1.msra.mxu0 0.0
  %1697 = vmatprep.subr.mxu0 0.0
  %1698 = vmatpush1.msra.mxu0 0.0
  %1699 = vmatprep.subr.mxu0 0.0
  %1700 = vmatpush1.msra.mxu0 0.0
  %1701 = vmatprep.subr.mxu0 0.0
  %1702 = vmatpush1.msra.mxu0 0.0
  %1703 = vmatprep.subr.mxu0 0.0
  %1704 = vmatpush1.msra.mxu0 0.0
  %1705 = vmatprep.subr.mxu0 0.0
  %1706 = vmatpush1.msra.mxu0 0.0
  %1707 = vmatprep.subr.mxu0 0.0
  %1708 = vmatpush1.msra.mxu0 0.0
  %1709 = vmatprep.subr.mxu0 0.0
  %1710 = vmatpush1.msra.mxu0 0.0
  %1711 = vmatprep.subr.mxu0 0.0
  %1712 = vmatpush1.msra.mxu0 0.0
  %1713 = vmatprep.subr.mxu0 0.0
  %1714 = vmatpush1.msra.mxu0 0.0
  %1715 = vmatprep.subr.mxu0 0.0
  %1716 = vmatpush1.msra.mxu0 0.0
  %1717 = vmatprep.subr.mxu0 0.0
  %1718 = vmatpush1.msra.mxu0 0.0
  %1719 = vmatprep.mubr.f32.mxu0 0.0
  %1720 = vmatmul.mubr.f32.gmra.mrb[0].mxu0 %v1632
  %v1721 = vpop.f32.mrb[0].mxu0
  %v1722 = vadd.f32 %v1629, %v1721
  %v1723 = vpop.f32.mrb[0].mxu0
  %1724 = vmatprep.mubr.f32.mxu0 0.0
  %1725 = vmatmul.mubr.f32.gmra.mrb[0].mxu0 %v1635
  %v1726 = vpop.f32.mrb[0].mxu0
  %v1727 = vadd.f32 %v1629, %v1726
  %v1728 = vpop.f32.mrb[0].mxu0
  %1729 = vmatprep.mubr.f32.mxu0 0.0
  %1730 = vmatmul.mubr.f32.gmra.mrb[0].mxu0 %v1638
  %v1731 = vpop.f32.mrb[0].mxu0
  %v1732 = vadd.f32 %v1629, %v1731
  %v1733 = vpop.f32.mrb[0].mxu0
  %1734 = vmatprep.mubr.f32.mxu0 0.0
  %1735 = vmatmul.mubr.f32.gmra.mrb[0].mxu0 %v1641
  %v1736 = vpop.f32.mrb[0].mxu0
  %v1737 = vadd.f32 %v1629, %v1736
  %v1738 = vpop.f32.mrb[0].mxu0
  %1739 = vmatprep.mubr.f32.mxu0 0.0
  %1740 = vmatmul.mubr.f32.gmra.mrb[0].mxu0 %v1644
  %v1741 = vpop.f32.mrb[0].mxu0
  %v1742 = vadd.f32 %v1629, %v1741
  %v1743 = vpop.f32.mrb[0].mxu0
  %1744 = vmatprep.mubr.f32.mxu0 0.0
  %1745 = vmatmul.mubr.f32.gmra.mrb[0].mxu0 %v1647
  %v1746 = vpop.f32.mrb[0].mxu0
  %v1747 = vadd.f32 %v1629, %v1746
  %v1748 = vpop.f32.mrb[0].mxu0
  %1749 = vmatprep.mubr.f32.mxu0 0.0
  %1750 = vmatmul.mubr.f32.gmra.mrb[0].mxu0 %v1650
  %v1751 = vpop.f32.mrb[0].mxu0
  %v1752 = vadd.f32 %v1629, %v1751
  %v1753 = vpop.f32.mrb[0].mxu0
  %1754 = vmatprep.mubr.f32.mxu0 0.0
  %1755 = vmatmul.mubr.f32.gmra.mrb[0].mxu0 %v1653
  %v1756 = vpop.f32.mrb[0].mxu0
  %v1757 = vadd.f32 %v1629, %v1756
  %v1758 = vpop.f32.mrb[0].mxu0
  %1759 = vdwg.mxu0
  %1760 = vst [vmem:[%s11] sm:$0xff] %v1722
  %1761 = vst [vmem:[%s11 + $0x8] sm:$0xff] %v1727
  %1762 = vst [vmem:[%s11 + $0x10] sm:$0xff] %v1732
  %1763 = vst [vmem:[%s11 + $0x18] sm:$0xff] %v1737
  %1764 = vst [vmem:[%s11 + $0x20] sm:$0xff] %v1742
  %1765 = vst [vmem:[%s11 + $0x28] sm:$0xff] %v1747
  %1766 = vst [vmem:[%s11 + $0x30] sm:$0xff] %v1752
  %1767 = vst [vmem:[%s11 + $0x38] sm:$0xff] %v1757
  // Predicated region
  $region46: #{gnn_forward.1} parent=0 // pred_check
    _
  $region47: #{gnn_forward.1} parent=0 // pred_check_branch
    %1769 = sbr.rel (0) target = $region49
  $region48: #{gnn_forward.1} parent=0 // pred_region
    _
  $region49: #{gnn_forward.1} parent=0 // pred_fallthru
    _
  // Predicated region
  $region50: #{gnn_forward.1} parent=0 // pred_check
    _
  $region51: #{gnn_forward.1} parent=0 // pred_check_branch
    %1771 = sbr.rel (0) target = $region53
  $region52: #{gnn_forward.1} parent=0 // pred_region
    _
  $region53: #{gnn_forward.1} parent=0 // pred_fallthru
    _

</llo_original>
